<compile_context>
chip_gen: v7x
topology: tpu7x:2x2x1
jax: 0.10.0
libtpu: 0.0.40
codegen_flags: <defaults>
</compile_context>

<pallas_src>
import jax
import jax.numpy as jnp
from jax.experimental import pallas as pl
from jax.experimental.pallas import tpu as pltpu

HIDDEN = 512
LN_EPS = 1e-5


def _round_up(n, m):
    return ((n + m - 1) // m) * m


def _ln_core(h):
    # gamma/beta already folded into the next Linear -> only normalize.
    # Two-pass statistics (PyTorch-equivalent, no cancellation).
    mu = jnp.mean(h, axis=-1, keepdims=True)
    d = h - mu
    var = jnp.mean(d * d, axis=-1, keepdims=True)
    return d * jax.lax.rsqrt(var + LN_EPS)


def qnet_kernel(x_ref,
                w1_ref, b1_ref,
                w2_ref, b2_ref,
                w3_ref, b3_ref,
                o_ref):
    # Layer 1: Linear(sd_pad, 512) + ReLU + LN-core   (bf16 MXU, f32 acc)
    h = jnp.dot(x_ref[...], w1_ref[...],
                preferred_element_type=jnp.float32) + b1_ref[...]
    h = jnp.maximum(h, 0.0)
    h = _ln_core(h)

    # Layer 2: Linear(512, 512) (g1/be1 folded in) + ReLU + LN-core
    h = jnp.dot(h.astype(w2_ref.dtype), w2_ref[...],
                preferred_element_type=jnp.float32) + b2_ref[...]
    h = jnp.maximum(h, 0.0)
    h = _ln_core(h)

    # Layer 3: Linear(512, ad_pad) (g2/be2 folded in) -> lane-dense bf16 store
    out = jnp.dot(h.astype(w3_ref.dtype), w3_ref[...],
                  preferred_element_type=jnp.float32) + b3_ref[...]
    o_ref[...] = out.astype(o_ref.dtype)


def prepare_params(params):
    """One-time padding / casting / LayerNorm-affine folding (not per step)."""
    w1, b1 = params["w1"], params["b1"]
    g1, be1 = params["g1"], params["be1"]
    w2, b2 = params["w2"], params["b2"]
    g2, be2 = params["g2"], params["be2"]
    w3, b3 = params["w3"], params["b3"]

    sd = int(w1.shape[0])
    ad = int(w3.shape[1])
    sd_pad = _round_up(sd, 128)   # full MXU contraction depth on layer 1
    ad_pad = _round_up(ad, 128)   # lane-dense output block

    # Fold LN1 affine into layer 2, LN2 affine into layer 3 (f32 math):
    #   (n*g + be) @ W + b  ==  n @ (diag(g) @ W) + (be @ W + b)
    w2f = w2 * g1.reshape(-1, 1)
    b2f = b2 + be1 @ w2
    w3f = w3 * g2.reshape(-1, 1)
    b3f = b3 + be2 @ w3

    return dict(
        w1=jnp.pad(w1, ((0, sd_pad - sd), (0, 0))).astype(jnp.bfloat16),
        b1=b1.astype(jnp.float32),
        w2=w2f.astype(jnp.bfloat16),
        b2=b2f.astype(jnp.float32),
        w3=jnp.pad(w3f, ((0, 0), (0, ad_pad - ad))).astype(jnp.bfloat16),
        b3=jnp.pad(b3f, ((0, 0), (0, ad_pad - ad))).astype(jnp.float32),
        sd=sd, ad=ad, sd_pad=sd_pad, ad_pad=ad_pad,
    )


def _choose_tiling(B, tile_b):
    b16 = _round_up(B, 16)                      # bf16 sublane tile is (16, 128)
    t = min(_round_up(tile_b, 16), b16)
    # v7x megacore: keep >= 2 grid steps when the batch allows it so
    # dimension_semantics=("parallel",) can shard across both TensorCores.
    if b16 > 16 and 2 * t > b16:
        t = _round_up(pl.cdiv(b16, 2), 16)
    b_pad = _round_up(b16, t)                   # no remainder blocks
    return t, b_pad


def qnet_forward(x, prep, *, tile_b=1024):
    B, sd = x.shape
    assert sd == prep["sd"], "x feature dim does not match prepared params"
    sd_pad, ad_pad, ad = prep["sd_pad"], prep["ad_pad"], prep["ad"]

    tile_b, b_pad = _choose_tiling(B, tile_b)

    # single-op pad + cast of the activations (zeros don't change the math)
    xp = jnp.pad(x.astype(jnp.bfloat16), ((0, b_pad - B), (0, sd_pad - sd)))

    const = lambda shape: pl.BlockSpec(shape, lambda i: (0, 0))

    out = pl.pallas_call(
        qnet_kernel,
        out_shape=jax.ShapeDtypeStruct((b_pad, ad_pad), jnp.bfloat16),
        grid_spec=pltpu.PrefetchScalarGridSpec(
            num_scalar_prefetch=0,
            grid=(b_pad // tile_b,),
            in_specs=[
                pl.BlockSpec((tile_b, sd_pad), lambda i: (i, 0)),  # x tile
                const((sd_pad, HIDDEN)),     # w1 (bf16, K-padded)
                const((1, HIDDEN)),          # b1
                const((HIDDEN, HIDDEN)),     # w2 (bf16, g1 folded)
                const((1, HIDDEN)),          # b2 (be1 folded)
                const((HIDDEN, ad_pad)),     # w3 (bf16, g2 folded, lane-padded)
                const((1, ad_pad)),          # b3 (be2 folded, lane-padded)
            ],
            out_specs=pl.BlockSpec((tile_b, ad_pad), lambda i: (i, 0)),
        ),
        compiler_params=pltpu.CompilerParams(
            dimension_semantics=("parallel",),
            vmem_limit_bytes=32 * 1024 * 1024),   # explicit: safe on v7x too
    )(xp, prep["w1"], prep["b1"], prep["w2"], prep["b2"],
      prep["w3"], prep["b3"])

    return out[:B, :ad].astype(x.dtype)


def init_params(key, sd, ad):
    """Deterministic synthetic init (shapes match nn.Linear / nn.LayerNorm)."""
    ks = jax.random.split(key, 10)

    def lin(kw, kb, fan_in, fan_out):
        bound = 1.0 / (fan_in ** 0.5)
        w = jax.random.uniform(kw, (fan_in, fan_out), jnp.float32, -bound, bound)
        b = jax.random.uniform(kb, (1, fan_out), jnp.float32, -bound, bound)
        return w, b

    w1, b1 = lin(ks[0], ks[1], sd, HIDDEN)
    w2, b2 = lin(ks[2], ks[3], HIDDEN, HIDDEN)
    w3, b3 = lin(ks[4], ks[5], HIDDEN, ad)
    # non-trivial LayerNorm affines so the wrapper-side folding is exercised
    g1 = 1.0 + 0.1 * jax.random.normal(ks[6], (1, HIDDEN), jnp.float32)
    be1 = 0.1 * jax.random.normal(ks[7], (1, HIDDEN), jnp.float32)
    g2 = 1.0 + 0.1 * jax.random.normal(ks[8], (1, HIDDEN), jnp.float32)
    be2 = 0.1 * jax.random.normal(ks[9], (1, HIDDEN), jnp.float32)
    return dict(w1=w1, b1=b1, g1=g1, be1=be1,
                w2=w2, b2=b2, g2=g2, be2=be2,
                w3=w3, b3=b3)


def qnet_ref(x, p):
    """Pure-JAX reference (PyTorch-style LN) with bf16 matmul inputs."""
    bf = lambda a: a.astype(jnp.bfloat16).astype(jnp.float32)

    def ln(h, g, b):
        mu = jnp.mean(h, axis=-1, keepdims=True)
        var = jnp.mean((h - mu) ** 2, axis=-1, keepdims=True)
        return (h - mu) * jax.lax.rsqrt(var + LN_EPS) * g + b

    h = jnp.maximum(bf(x) @ bf(p["w1"]) + p["b1"], 0.0)
    h = ln(h, p["g1"], p["be1"])
    h = jnp.maximum(bf(h) @ bf(p["w2"]) + p["b2"], 0.0)
    h = ln(h, p["g2"], p["be2"])
    return bf(h) @ bf(p["w3"]) + p["b3"]


if __name__ == "__main__":
    key = jax.random.PRNGKey(0)
    k_x, k_p = jax.random.split(key)

    # Small, deliberately unaligned shapes: exercises K-padding (24->128),
    # output lane-padding (6->128), batch padding (37->48) and a 3-step grid.
    B, sd, ad = 37, 24, 6
    x = jax.random.normal(k_x, (B, sd), jnp.float32)
    params = init_params(k_p, sd, ad)
    prep = prepare_params(params)

    out = qnet_forward(x, prep, tile_b=16)
    out = jax.block_until_ready(out)

    ref = qnet_ref(x, params)
    assert out.shape == (B, ad)
    assert jnp.allclose(out, ref, atol=2e-2, rtol=2e-2), \
        float(jnp.max(jnp.abs(out - ref)))

    print("KERNEL_OK")
</pallas_src>

<mosaic_0001>
module attributes {stable_mosaic.version = 11 : i64} {
  func.func @qnet_kernel(%arg0: i32, %arg1: memref<16x128xbf16, #tpu.memory_space<vmem>>, %arg2: memref<128x512xbf16, #tpu.memory_space<vmem>>, %arg3: memref<1x512xf32, #tpu.memory_space<vmem>>, %arg4: memref<512x512xbf16, #tpu.memory_space<vmem>>, %arg5: memref<1x512xf32, #tpu.memory_space<vmem>>, %arg6: memref<512x128xbf16, #tpu.memory_space<vmem>>, %arg7: memref<1x128xf32, #tpu.memory_space<vmem>>, %arg8: memref<16x128xbf16, #tpu.memory_space<vmem>>) attributes {dimension_semantics = [#tpu.dimension_semantics<parallel>], iteration_bounds = array<i64: 3>, scalar_prefetch = 0 : i64, scratch_operands = 0 : i64, tpu.core_type = #tpu.core_type<tc>, window_params = [{transform_indices = @transform_0, window_bounds = array<i64: 16, 128>}, {pipeline_mode = #tpu.pipeline_mode<synchronous>, transform_indices = @transform_1, window_bounds = array<i64: 128, 512>}, {pipeline_mode = #tpu.pipeline_mode<synchronous>, transform_indices = @transform_2, window_bounds = array<i64: 1, 512>}, {pipeline_mode = #tpu.pipeline_mode<synchronous>, transform_indices = @transform_3, window_bounds = array<i64: 512, 512>}, {pipeline_mode = #tpu.pipeline_mode<synchronous>, transform_indices = @transform_4, window_bounds = array<i64: 1, 512>}, {pipeline_mode = #tpu.pipeline_mode<synchronous>, transform_indices = @transform_5, window_bounds = array<i64: 512, 128>}, {pipeline_mode = #tpu.pipeline_mode<synchronous>, transform_indices = @transform_6, window_bounds = array<i64: 1, 128>}, {transform_indices = @transform_7, window_bounds = array<i64: 16, 128>}]} {
    %c0 = arith.constant 0 : index
    %c0_0 = arith.constant 0 : index
    %0 = vector.load %arg1[%c0, %c0_0] : memref<16x128xbf16, #tpu.memory_space<vmem>>, vector<16x128xbf16>
    %c0_1 = arith.constant 0 : index
    %c0_2 = arith.constant 0 : index
    %1 = vector.load %arg2[%c0_1, %c0_2] : memref<128x512xbf16, #tpu.memory_space<vmem>>, vector<128x512xbf16>
    %cst = arith.constant dense<0.000000e+00> : vector<16x512xf32>
    %2 = tpu.matmul %0, %1, %cst {dimension_numbers = #tpu.dot_dimension_numbers<[1], [0], [0], [1], [0, 0, 1, 1], [], []>} : vector<16x128xbf16>, vector<128x512xbf16>, vector<16x512xf32> -> vector<16x512xf32>
    %c0_3 = arith.constant 0 : index
    %c0_4 = arith.constant 0 : index
    %3 = vector.load %arg3[%c0_3, %c0_4] : memref<1x512xf32, #tpu.memory_space<vmem>>, vector<1x512xf32>
    %4 = vector.broadcast %3 : vector<1x512xf32> to vector<16x512xf32>
    %5 = arith.addf %2, %4 : vector<16x512xf32>
    %cst_5 = arith.constant 0.000000e+00 : f32
    %6 = vector.broadcast %cst_5 : f32 to vector<16x512xf32>
    %7 = arith.maximumf %5, %6 : vector<16x512xf32>
    %cst_6 = arith.constant dense<0.000000e+00> : vector<16xf32>
    %8 = vector.multi_reduction <add>, %7, %cst_6 [1] : vector<16x512xf32> to vector<16xf32>
    %9 = vector.shape_cast %8 : vector<16xf32> to vector<16x1xf32>
    %cst_7 = arith.constant 5.120000e+02 : f32
    %10 = vector.broadcast %cst_7 : f32 to vector<16x1xf32>
    %11 = arith.divf %9, %10 : vector<16x1xf32>
    %12 = vector.broadcast %11 : vector<16x1xf32> to vector<16x512xf32>
    %13 = arith.subf %7, %12 : vector<16x512xf32>
    %14 = arith.mulf %13, %13 : vector<16x512xf32>
    %cst_8 = arith.constant dense<0.000000e+00> : vector<16xf32>
    %15 = vector.multi_reduction <add>, %14, %cst_8 [1] : vector<16x512xf32> to vector<16xf32>
    %16 = vector.shape_cast %15 : vector<16xf32> to vector<16x1xf32>
    %cst_9 = arith.constant 5.120000e+02 : f32
    %17 = vector.broadcast %cst_9 : f32 to vector<16x1xf32>
    %18 = arith.divf %16, %17 : vector<16x1xf32>
    %cst_10 = arith.constant 9.99999974E-6 : f32
    %19 = vector.broadcast %cst_10 : f32 to vector<16x1xf32>
    %20 = arith.addf %18, %19 : vector<16x1xf32>
    %21 = math.rsqrt %20 : vector<16x1xf32>
    %22 = vector.broadcast %21 : vector<16x1xf32> to vector<16x512xf32>
    %23 = arith.mulf %13, %22 : vector<16x512xf32>
    %24 = arith.truncf %23 : vector<16x512xf32> to vector<16x512xbf16>
    %c0_11 = arith.constant 0 : index
    %c0_12 = arith.constant 0 : index
    %25 = vector.load %arg4[%c0_11, %c0_12] : memref<512x512xbf16, #tpu.memory_space<vmem>>, vector<512x512xbf16>
    %cst_13 = arith.constant dense<0.000000e+00> : vector<16x512xf32>
    %26 = tpu.matmul %24, %25, %cst_13 {dimension_numbers = #tpu.dot_dimension_numbers<[1], [0], [0], [1], [0, 0, 1, 1], [], []>} : vector<16x512xbf16>, vector<512x512xbf16>, vector<16x512xf32> -> vector<16x512xf32>
    %c0_14 = arith.constant 0 : index
    %c0_15 = arith.constant 0 : index
    %27 = vector.load %arg5[%c0_14, %c0_15] : memref<1x512xf32, #tpu.memory_space<vmem>>, vector<1x512xf32>
    %28 = vector.broadcast %27 : vector<1x512xf32> to vector<16x512xf32>
    %29 = arith.addf %26, %28 : vector<16x512xf32>
    %cst_16 = arith.constant 0.000000e+00 : f32
    %30 = vector.broadcast %cst_16 : f32 to vector<16x512xf32>
    %31 = arith.maximumf %29, %30 : vector<16x512xf32>
    %cst_17 = arith.constant dense<0.000000e+00> : vector<16xf32>
    %32 = vector.multi_reduction <add>, %31, %cst_17 [1] : vector<16x512xf32> to vector<16xf32>
    %33 = vector.shape_cast %32 : vector<16xf32> to vector<16x1xf32>
    %cst_18 = arith.constant 5.120000e+02 : f32
    %34 = vector.broadcast %cst_18 : f32 to vector<16x1xf32>
    %35 = arith.divf %33, %34 : vector<16x1xf32>
    %36 = vector.broadcast %35 : vector<16x1xf32> to vector<16x512xf32>
    %37 = arith.subf %31, %36 : vector<16x512xf32>
    %38 = arith.mulf %37, %37 : vector<16x512xf32>
    %cst_19 = arith.constant dense<0.000000e+00> : vector<16xf32>
    %39 = vector.multi_reduction <add>, %38, %cst_19 [1] : vector<16x512xf32> to vector<16xf32>
    %40 = vector.shape_cast %39 : vector<16xf32> to vector<16x1xf32>
    %cst_20 = arith.constant 5.120000e+02 : f32
    %41 = vector.broadcast %cst_20 : f32 to vector<16x1xf32>
    %42 = arith.divf %40, %41 : vector<16x1xf32>
    %cst_21 = arith.constant 9.99999974E-6 : f32
    %43 = vector.broadcast %cst_21 : f32 to vector<16x1xf32>
    %44 = arith.addf %42, %43 : vector<16x1xf32>
    %45 = math.rsqrt %44 : vector<16x1xf32>
    %46 = vector.broadcast %45 : vector<16x1xf32> to vector<16x512xf32>
    %47 = arith.mulf %37, %46 : vector<16x512xf32>
    %48 = arith.truncf %47 : vector<16x512xf32> to vector<16x512xbf16>
    %c0_22 = arith.constant 0 : index
    %c0_23 = arith.constant 0 : index
    %49 = vector.load %arg6[%c0_22, %c0_23] : memref<512x128xbf16, #tpu.memory_space<vmem>>, vector<512x128xbf16>
    %cst_24 = arith.constant dense<0.000000e+00> : vector<16x128xf32>
    %50 = tpu.matmul %48, %49, %cst_24 {dimension_numbers = #tpu.dot_dimension_numbers<[1], [0], [0], [1], [0, 0, 1, 1], [], []>} : vector<16x512xbf16>, vector<512x128xbf16>, vector<16x128xf32> -> vector<16x128xf32>
    %c0_25 = arith.constant 0 : index
    %c0_26 = arith.constant 0 : index
    %51 = vector.load %arg7[%c0_25, %c0_26] : memref<1x128xf32, #tpu.memory_space<vmem>>, vector<1x128xf32>
    %52 = vector.broadcast %51 : vector<1x128xf32> to vector<16x128xf32>
    %53 = arith.addf %50, %52 : vector<16x128xf32>
    %54 = arith.truncf %53 : vector<16x128xf32> to vector<16x128xbf16>
    %c0_27 = arith.constant 0 : index
    %c0_28 = arith.constant 0 : index
    %55 = vector.load %arg8[%c0_27, %c0_28] : memref<16x128xbf16, #tpu.memory_space<vmem>>, vector<16x128xbf16>
    tpu.vector_store %arg8[%c0_27, %c0_28], %54 {strides = array<i32>} : memref<16x128xbf16, #tpu.memory_space<vmem>>, vector<16x128xbf16>,
    return
  }
  func.func @transform_0(%arg0: i32) -> (i32, i32) {
    %c0_i32 = arith.constant 0 : i32
    %c0_i32_0 = arith.constant 0 : i32
    return %arg0, %c0_i32 : i32, i32
  }
  func.func @transform_1(%arg0: i32) -> (i32, i32) {
    %c0_i32 = arith.constant 0 : i32
    %c0_i32_0 = arith.constant 0 : i32
    %c0_i32_1 = arith.constant 0 : i32
    return %c0_i32, %c0_i32_0 : i32, i32
  }
  func.func @transform_2(%arg0: i32) -> (i32, i32) {
    %c0_i32 = arith.constant 0 : i32
    %c0_i32_0 = arith.constant 0 : i32
    %c0_i32_1 = arith.constant 0 : i32
    return %c0_i32, %c0_i32_0 : i32, i32
  }
  func.func @transform_3(%arg0: i32) -> (i32, i32) {
    %c0_i32 = arith.constant 0 : i32
    %c0_i32_0 = arith.constant 0 : i32
    %c0_i32_1 = arith.constant 0 : i32
    return %c0_i32, %c0_i32_0 : i32, i32
  }
  func.func @transform_4(%arg0: i32) -> (i32, i32) {
    %c0_i32 = arith.constant 0 : i32
    %c0_i32_0 = arith.constant 0 : i32
    %c0_i32_1 = arith.constant 0 : i32
    return %c0_i32, %c0_i32_0 : i32, i32
  }
  func.func @transform_5(%arg0: i32) -> (i32, i32) {
    %c0_i32 = arith.constant 0 : i32
    %c0_i32_0 = arith.constant 0 : i32
    %c0_i32_1 = arith.constant 0 : i32
    return %c0_i32, %c0_i32_0 : i32, i32
  }
  func.func @transform_6(%arg0: i32) -> (i32, i32) {
    %c0_i32 = arith.constant 0 : i32
    %c0_i32_0 = arith.constant 0 : i32
    %c0_i32_1 = arith.constant 0 : i32
    return %c0_i32, %c0_i32_0 : i32, i32
  }
  func.func @transform_7(%arg0: i32) -> (i32, i32) {
    %c0_i32 = arith.constant 0 : i32
    %c0_i32_0 = arith.constant 0 : i32
    return %arg0, %c0_i32 : i32, i32
  }
}

</mosaic_0001>

<llo_original>
// kernel: tpu_custom_call.1
$region0: #{tpu_custom_call.1}
  #allocation0 [shape = 'u32[]', space=smem, size = 0x4, offset = 0x4, fixed_abs, tag = 'smem constant byte address 0x4 - core index']
  #allocation1 [shape = 'u32[144,128]{1,0:T(1,128)}', space=vmem, size = 0x12000, scoped, tag = 'internal scratch']
  %s0 = inlined_call_operand.hbm [shape: bf16[48,128], index: 0, kind: input, shape index: {}]
  %s1 = inlined_call_operand.hbm [shape: bf16[128,512], index: 1, kind: input, shape index: {}]
  %s2 = inlined_call_operand.vmem [shape: f32[1,512], index: 2, kind: input, shape index: {}]
  %s3 = inlined_call_operand.hbm [shape: bf16[512,512], index: 3, kind: input, shape index: {}]
  %s4 = inlined_call_operand.vmem [shape: f32[1,512], index: 4, kind: input, shape index: {}]
  %s5 = inlined_call_operand.hbm [shape: bf16[512,128], index: 5, kind: input, shape index: {}]
  %s6 = inlined_call_operand.vmem [shape: f32[1,128], index: 6, kind: input, shape index: {}]
  %s7 = inlined_call_operand.hbm [shape: bf16[48,128], index: 7, kind: output, shape index: {}]
  %s8 = sld [smem:[#allocation0]]
  $region77: #{tpu_custom_call.1} parent=0
    _
  %s10 = ssub.s32 1, %s8
  %s11 = scalar_select 0, %s10, %s8
  $region1: #{tpu_custom_call.1} parent=0
    #allocation2 [shape = 'u8[8192]{0}', space=vmem, size = 0x2000, scoped, tag = 'input window, operand 0']
    #allocation3 [shape = 's32[2]{0}', space=sflag, size = 0x8, scoped, tag = 'scoped memory for tpu_custom_call.1']
    #allocation4 [shape = 's32[2]{0}', space=sflag, size = 0x8, scoped, tag = 'scoped memory for tpu_custom_call.1']
    #allocation5 [shape = 'u8[131072]{0}', space=vmem, size = 0x20000, scoped, tag = 'input window, operand 1, single buffered']
    #allocation6 [shape = 's32[1]{0}', space=sflag, size = 0x4, scoped, tag = 'scoped memory for tpu_custom_call.1']
    #allocation7 [shape = 'u8[524288]{0}', space=vmem, size = 0x80000, scoped, tag = 'input window, operand 3, single buffered']
    #allocation8 [shape = 'u8[131072]{0}', space=vmem, size = 0x20000, scoped, tag = 'input window, operand 5, single buffered']
    #allocation9 [shape = 's32[1]{0}', space=sflag, size = 0x4, scoped, tag = 'scoped memory for tpu_custom_call.1']
    #allocation10 [shape = 'u8[8192]{0}', space=vmem, size = 0x2000, scoped, tag = 'output window, operand 0']
    %12 = vsyncpa [#allocation3], 0
    %s13 = scalar_lea.sflag [#allocation3], 1
    %14 = vsyncpa %s13, 0
    %15 = vsyncpa [#allocation6], 0
    %16 = vsyncpa [#allocation9], 0
    %17 = vsyncpa [#allocation4], 0
    %s18 = scalar_lea.sflag [#allocation4], 1
    %19 = vsyncpa %s18, 0
    loop: start=0, step=1, limit=5
    $region2: #{tpu_custom_call.1} parent=1 // loop_pre_header
      _
    $region3: #{tpu_custom_call.1} parent=1 // loop_header
      %s21 = sphi 0, %s25
      %p22 = scmp.ge.s32.totalorder %s21, 5
      %s31 = sphi 0, %s33
      %s34 = sphi 0, %s31
      %s35 = sphi 0, %s34
      %s51 = sphi 0, %s35
      %s55 = sphi 0, %s55
      %s57 = sphi 0, %s55
      %s58 = sphi 0, %s57
      %s72 = sphi 0, %s58
      %s76 = sphi 0, %s76
      %s78 = sphi 0, %s76
      %s79 = sphi 0, %s78
      %s93 = sphi 0, %s79
      %s97 = sphi 0, %s97
      %s99 = sphi 0, %s97
      %s100 = sphi 0, %s99
      %s114 = sphi 0, %s100
      %s118 = sphi 0, %s118
      %s120 = sphi 0, %s118
      %s121 = sphi 0, %s120
      %s135 = sphi 0, %s121
      %s139 = sphi 0, %s139
      %s141 = sphi 0, %s139
      %s142 = sphi 0, %s141
      %s156 = sphi 0, %s142
      %s160 = sphi 0, %s160
      %s162 = sphi 0, %s160
      %s163 = sphi 0, %s162
      %s177 = sphi 0, %s163
      %s183 = sphi 0, %s185
      %s186 = sphi 0, %s183
      %s187 = sphi 0, %s186
      %s203 = sphi 0, %s187
    $region4: #{tpu_custom_call.1} parent=1 // loop_header_branch
      %24 = sbr.rel (%p22) target = $region8
    $region5: #{tpu_custom_call.1} parent=1 // loop_body
      %s26 = ssub.s32 %s21, 1
      %s27 = ssub.s32 %s21, 2
      %s28 = sadd.s32 %s21, 1
      %s29 = ssub.s32 %s21, %s28
      %p30 = scmp.eq.s32.totalorder %s29, 0
      %s32 = sadd.s32 %s31, 1
      %s33 = scalar_select %p30, %s31, %s32
      %p36 = pneg %p30
      %p37 = scmp.eq.s32.totalorder %s21, 2
      %p38 = por %p36, %p37
      %p39 = scmp.ne.s32.totalorder %s31, %s34
      %p40 = scmp.eq.s32.totalorder %s21, 0
      %p41 = por %p39, %p40
      %p42 = scmp.ne.s32.totalorder %s31, %s34
      %p43 = scmp.eq.s32.totalorder %s26, 2
      %p44 = por %p42, %p43
      %p45 = scmp.ne.s32.totalorder %s34, %s35
      %p46 = scmp.eq.s32.totalorder %s26, 0
      %p47 = por %p45, %p46
      %p48 = scmp.ne.s32.totalorder %s34, %s35
      %p49 = scmp.eq.s32.totalorder %s27, 2
      %p50 = por %p48, %p49
      %p52 = scmp.ne.s32.totalorder %s35, %s51
      %p53 = scmp.eq.s32.totalorder %s27, 0
      %p54 = por %p52, %p53
      %s56 = sadd.s32 %s55, 1
      %p59 = scmp.eq.s32.totalorder %s21, 2
      %p60 = scmp.ne.s32.totalorder %s55, %s57
      %p61 = scmp.eq.s32.totalorder %s21, 0
      %p62 = por %p60, %p61
      %p63 = scmp.ne.s32.totalorder %s55, %s57
      %p64 = scmp.eq.s32.totalorder %s26, 2
      %p65 = por %p63, %p64
      %p66 = scmp.ne.s32.totalorder %s57, %s58
      %p67 = scmp.eq.s32.totalorder %s26, 0
      %p68 = por %p66, %p67
      %p69 = scmp.ne.s32.totalorder %s57, %s58
      %p70 = scmp.eq.s32.totalorder %s27, 2
      %p71 = por %p69, %p70
      %p73 = scmp.ne.s32.totalorder %s58, %s72
      %p74 = scmp.eq.s32.totalorder %s27, 0
      %p75 = por %p73, %p74
      %s77 = sadd.s32 %s76, 1
      %p80 = scmp.eq.s32.totalorder %s21, 2
      %p81 = scmp.ne.s32.totalorder %s76, %s78
      %p82 = scmp.eq.s32.totalorder %s21, 0
      %p83 = por %p81, %p82
      %p84 = scmp.ne.s32.totalorder %s76, %s78
      %p85 = scmp.eq.s32.totalorder %s26, 2
      %p86 = por %p84, %p85
      %p87 = scmp.ne.s32.totalorder %s78, %s79
      %p88 = scmp.eq.s32.totalorder %s26, 0
      %p89 = por %p87, %p88
      %p90 = scmp.ne.s32.totalorder %s78, %s79
      %p91 = scmp.eq.s32.totalorder %s27, 2
      %p92 = por %p90, %p91
      %p94 = scmp.ne.s32.totalorder %s79, %s93
      %p95 = scmp.eq.s32.totalorder %s27, 0
      %p96 = por %p94, %p95
      %s98 = sadd.s32 %s97, 1
      %p101 = scmp.eq.s32.totalorder %s21, 2
      %p102 = scmp.ne.s32.totalorder %s97, %s99
      %p103 = scmp.eq.s32.totalorder %s21, 0
      %p104 = por %p102, %p103
      %p105 = scmp.ne.s32.totalorder %s97, %s99
      %p106 = scmp.eq.s32.totalorder %s26, 2
      %p107 = por %p105, %p106
      %p108 = scmp.ne.s32.totalorder %s99, %s100
      %p109 = scmp.eq.s32.totalorder %s26, 0
      %p110 = por %p108, %p109
      %p111 = scmp.ne.s32.totalorder %s99, %s100
      %p112 = scmp.eq.s32.totalorder %s27, 2
      %p113 = por %p111, %p112
      %p115 = scmp.ne.s32.totalorder %s100, %s114
      %p116 = scmp.eq.s32.totalorder %s27, 0
      %p117 = por %p115, %p116
      %s119 = sadd.s32 %s118, 1
      %p122 = scmp.eq.s32.totalorder %s21, 2
      %p123 = scmp.ne.s32.totalorder %s118, %s120
      %p124 = scmp.eq.s32.totalorder %s21, 0
      %p125 = por %p123, %p124
      %p126 = scmp.ne.s32.totalorder %s118, %s120
      %p127 = scmp.eq.s32.totalorder %s26, 2
      %p128 = por %p126, %p127
      %p129 = scmp.ne.s32.totalorder %s120, %s121
      %p130 = scmp.eq.s32.totalorder %s26, 0
      %p131 = por %p129, %p130
      %p132 = scmp.ne.s32.totalorder %s120, %s121
      %p133 = scmp.eq.s32.totalorder %s27, 2
      %p134 = por %p132, %p133
      %p136 = scmp.ne.s32.totalorder %s121, %s135
      %p137 = scmp.eq.s32.totalorder %s27, 0
      %p138 = por %p136, %p137
      %s140 = sadd.s32 %s139, 1
      %p143 = scmp.eq.s32.totalorder %s21, 2
      %p144 = scmp.ne.s32.totalorder %s139, %s141
      %p145 = scmp.eq.s32.totalorder %s21, 0
      %p146 = por %p144, %p145
      %p147 = scmp.ne.s32.totalorder %s139, %s141
      %p148 = scmp.eq.s32.totalorder %s26, 2
      %p149 = por %p147, %p148
      %p150 = scmp.ne.s32.totalorder %s141, %s142
      %p151 = scmp.eq.s32.totalorder %s26, 0
      %p152 = por %p150, %p151
      %p153 = scmp.ne.s32.totalorder %s141, %s142
      %p154 = scmp.eq.s32.totalorder %s27, 2
      %p155 = por %p153, %p154
      %p157 = scmp.ne.s32.totalorder %s142, %s156
      %p158 = scmp.eq.s32.totalorder %s27, 0
      %p159 = por %p157, %p158
      %s161 = sadd.s32 %s160, 1
      %p164 = scmp.eq.s32.totalorder %s21, 2
      %p165 = scmp.ne.s32.totalorder %s160, %s162
      %p166 = scmp.eq.s32.totalorder %s21, 0
      %p167 = por %p165, %p166
      %p168 = scmp.ne.s32.totalorder %s160, %s162
      %p169 = scmp.eq.s32.totalorder %s26, 2
      %p170 = por %p168, %p169
      %p171 = scmp.ne.s32.totalorder %s162, %s163
      %p172 = scmp.eq.s32.totalorder %s26, 0
      %p173 = por %p171, %p172
      %p174 = scmp.ne.s32.totalorder %s162, %s163
      %p175 = scmp.eq.s32.totalorder %s27, 2
      %p176 = por %p174, %p175
      %p178 = scmp.ne.s32.totalorder %s163, %s177
      %p179 = scmp.eq.s32.totalorder %s27, 0
      %p180 = por %p178, %p179
      %s181 = ssub.s32 %s21, %s28
      %p182 = scmp.eq.s32.totalorder %s181, 0
      %s184 = sadd.s32 %s183, 1
      %s185 = scalar_select %p182, %s183, %s184
      %p188 = pneg %p182
      %p189 = scmp.eq.s32.totalorder %s21, 2
      %p190 = por %p188, %p189
      %p191 = scmp.ne.s32.totalorder %s183, %s186
      %p192 = scmp.eq.s32.totalorder %s21, 0
      %p193 = por %p191, %p192
      %p194 = scmp.ne.s32.totalorder %s183, %s186
      %p195 = scmp.eq.s32.totalorder %s26, 2
      %p196 = por %p194, %p195
      %p197 = scmp.ne.s32.totalorder %s186, %s187
      %p198 = scmp.eq.s32.totalorder %s26, 0
      %p199 = por %p197, %p198
      %p200 = scmp.ne.s32.totalorder %s186, %s187
      %p201 = scmp.eq.s32.totalorder %s27, 2
      %p202 = por %p200, %p201
      %p204 = scmp.ne.s32.totalorder %s187, %s203
      %p205 = scmp.eq.s32.totalorder %s27, 0
      %p206 = por %p204, %p205
      %p207 = scmp.le.s32.totalorder 1, %s21
      %p208 = scmp.lt.s32.totalorder %s21, 4
      %p209 = pnand %p207, %p208
      %p210 = pneg %p209
      // Predicated region
      $region9: #{tpu_custom_call.1} parent=5 // pred_check
        _
      $region10: #{tpu_custom_call.1} parent=5 // pred_check_branch
        %212 = sbr.rel (%p209) target = $region12
      $region11: #{tpu_custom_call.1} parent=5 // pred_region
        %s213 = ssub.s32 %s21, 1
        // Predicated region
        $region13: #{tpu_custom_call.1} parent=11 // pred_check
          %p214 = pneg %p68
        $region14: #{tpu_custom_call.1} parent=11 // pred_check_branch
          %216 = sbr.rel (%p214) target = $region16
        $region15: #{tpu_custom_call.1} parent=11 // pred_region
          %s218 = ssub.s32 4096, 4096
          %219 = vsyncadd [#allocation6], %s218
          %s220 = sshll.u32 [#allocation5], 4
          %s221 = int_to_ptr.vmem [resolvable:$true] %s220
          %226 = dma.hbm_to_vmem [thread:$0]  %s1, 4096, %s221, [#allocation6], 256, 256, 16
        $region16: #{tpu_custom_call.1} parent=11 // pred_fallthru
          _
        // Predicated region
        $region17: #{tpu_custom_call.1} parent=11 // pred_check
          %p227 = pneg %p89
        $region18: #{tpu_custom_call.1} parent=11 // pred_check_branch
          %229 = sbr.rel (%p227) target = $region20
        $region19: #{tpu_custom_call.1} parent=11 // pred_region
          _
        $region20: #{tpu_custom_call.1} parent=11 // pred_fallthru
          _
        // Predicated region
        $region21: #{tpu_custom_call.1} parent=11 // pred_check
          %p230 = pneg %p110
        $region22: #{tpu_custom_call.1} parent=11 // pred_check_branch
          %232 = sbr.rel (%p230) target = $region24
        $region23: #{tpu_custom_call.1} parent=11 // pred_region
          %s234 = ssub.s32 16384, 16384
          %235 = vsyncadd [#allocation6], %s234
          %s236 = sshll.u32 [#allocation7], 4
          %s237 = int_to_ptr.vmem [resolvable:$true] %s236
          %242 = dma.hbm_to_vmem [thread:$0]  %s3, 16384, %s237, [#allocation6], 256, 256, 16
        $region24: #{tpu_custom_call.1} parent=11 // pred_fallthru
          _
        // Predicated region
        $region25: #{tpu_custom_call.1} parent=11 // pred_check
          %p243 = pneg %p131
        $region26: #{tpu_custom_call.1} parent=11 // pred_check_branch
          %245 = sbr.rel (%p243) target = $region28
        $region27: #{tpu_custom_call.1} parent=11 // pred_region
          _
        $region28: #{tpu_custom_call.1} parent=11 // pred_fallthru
          _
        // Predicated region
        $region29: #{tpu_custom_call.1} parent=11 // pred_check
          %p246 = pneg %p152
        $region30: #{tpu_custom_call.1} parent=11 // pred_check_branch
          %248 = sbr.rel (%p246) target = $region32
        $region31: #{tpu_custom_call.1} parent=11 // pred_region
          %s250 = ssub.s32 4096, 4096
          %251 = vsyncadd [#allocation9], %s250
          %s252 = sshll.u32 [#allocation8], 4
          %s253 = int_to_ptr.vmem [resolvable:$true] %s252
          %258 = dma.hbm_to_vmem [thread:$0]  %s5, 4096, %s253, [#allocation9], 64, 64, 4
        $region32: #{tpu_custom_call.1} parent=11 // pred_fallthru
          _
        // Predicated region
        $region33: #{tpu_custom_call.1} parent=11 // pred_check
          %p259 = pneg %p173
        $region34: #{tpu_custom_call.1} parent=11 // pred_check_branch
          %261 = sbr.rel (%p259) target = $region36
        $region35: #{tpu_custom_call.1} parent=11 // pred_region
          _
        $region36: #{tpu_custom_call.1} parent=11 // pred_fallthru
          _
      $region12: #{tpu_custom_call.1} parent=5 // pred_fallthru
        _
      %p262 = scmp.lt.s32.totalorder %s21, 3
      // Predicated region
      $region37: #{tpu_custom_call.1} parent=5 // pred_check
        %p263 = pneg %p262
      $region38: #{tpu_custom_call.1} parent=5 // pred_check_branch
        %265 = sbr.rel (%p263) target = $region40
      $region39: #{tpu_custom_call.1} parent=5 // pred_region
        // Predicated region
        $region41: #{tpu_custom_call.1} parent=39 // pred_check
          %p266 = pneg %p41
        $region42: #{tpu_custom_call.1} parent=39 // pred_check_branch
          %268 = sbr.rel (%p266) target = $region44
        $region43: #{tpu_custom_call.1} parent=39 // pred_region
          %s269 = sand.u32 %s31, 1
          %s270 = scalar_lea.sflag [#allocation3], %s269
          %s271 = sand.u32 %s31, 1
          %s272 = smul.addr %s271, 8
          %s273 = scalar_lea.vmem [#allocation2], %s272
          %s274 = smul.u32 2, %s21
          %s276 = ssub.s32 128, 128
          %277 = vsyncadd %s270, %s276
          %s278 = smul.addr %s274, 64
          %s279 = scalar_lea.hbm %s0, %s278
          %s280 = sshll.u32 %s273, 4
          %s281 = int_to_ptr.vmem [resolvable:$true] %s280
          %286 = dma.hbm_to_vmem [thread:$0]  %s279, 128, %s281, %s270, 64, 64, 4
        $region44: #{tpu_custom_call.1} parent=39 // pred_fallthru
          _
      $region40: #{tpu_custom_call.1} parent=5 // pred_fallthru
        _
      %p287 = scmp.le.s32.totalorder 1, %s21
      %p288 = scmp.lt.s32.totalorder %s21, 4
      %p289 = pnand %p287, %p288
      %p290 = pneg %p289
      // Predicated region
      $region45: #{tpu_custom_call.1} parent=5 // pred_check
        _
      $region46: #{tpu_custom_call.1} parent=5 // pred_check_branch
        %292 = sbr.rel (%p289) target = $region48
      $region47: #{tpu_custom_call.1} parent=5 // pred_region
        %s293 = ssub.s32 %s21, 1
        %s294 = sand.u32 %s34, 1
        %s295 = scalar_lea.sflag [#allocation3], %s294
        %s296 = sand.u32 %s34, 1
        %s297 = smul.addr %s296, 8
        %s298 = scalar_lea.vmem [#allocation2], %s297
        // Predicated region
        $region49: #{tpu_custom_call.1} parent=47 // pred_check
          %p299 = pneg %p47
        $region50: #{tpu_custom_call.1} parent=47 // pred_check_branch
          %301 = sbr.rel (%p299) target = $region52
        $region51: #{tpu_custom_call.1} parent=47 // pred_region
          %302 = dma.done %s295, 128
        $region52: #{tpu_custom_call.1} parent=47 // pred_fallthru
          _
        // Predicated region
        $region53: #{tpu_custom_call.1} parent=47 // pred_check
          %p303 = pneg %p68
        $region54: #{tpu_custom_call.1} parent=47 // pred_check_branch
          %305 = sbr.rel (%p303) target = $region56
        $region55: #{tpu_custom_call.1} parent=47 // pred_region
          %306 = dma.done [#allocation6], 4096
        $region56: #{tpu_custom_call.1} parent=47 // pred_fallthru
          _
        // Predicated region
        $region57: #{tpu_custom_call.1} parent=47 // pred_check
          %p307 = pneg %p110
        $region58: #{tpu_custom_call.1} parent=47 // pred_check_branch
          %309 = sbr.rel (%p307) target = $region60
        $region59: #{tpu_custom_call.1} parent=47 // pred_region
          %310 = dma.done [#allocation6], 16384
        $region60: #{tpu_custom_call.1} parent=47 // pred_fallthru
          _
        // Predicated region
        $region61: #{tpu_custom_call.1} parent=47 // pred_check
          %p311 = pneg %p152
        $region62: #{tpu_custom_call.1} parent=47 // pred_check_branch
          %313 = sbr.rel (%p311) target = $region64
        $region63: #{tpu_custom_call.1} parent=47 // pred_region
          %314 = dma.done [#allocation9], 4096
        $region64: #{tpu_custom_call.1} parent=47 // pred_fallthru
          _
        %s315 = sand.u32 %s34, 1
        %s316 = scalar_lea.sflag [#allocation3], %s315
        %s317 = sand.u32 %s34, 1
        %s318 = smul.addr %s317, 8
        %s319 = scalar_lea.vmem [#allocation2], %s318
        %p320 = pneg %p47
        %p321 = pneg %p44
        %p322 = pneg %p68
        %p323 = pneg %p65
        %p324 = pneg %p89
        %p325 = pneg %p86
        %p326 = pneg %p110
        %p327 = pneg %p107
        %p328 = pneg %p131
        %p329 = pneg %p128
        %p330 = pneg %p152
        %p331 = pneg %p149
        %p332 = pneg %p173
        %p333 = pneg %p170
        %p334 = pneg %p199
        %p335 = pneg %p196
        %s336 = sand.u32 %s186, 1
        %s337 = scalar_lea.sflag [#allocation4], %s336
        %s338 = sand.u32 %s186, 1
        %s339 = smul.addr %s338, 8
        %s340 = scalar_lea.vmem [#allocation10], %s339
        %s341 = smul.u32 2, %s26
        %s342 = smul.u32 2, %s26
        %v344 = vld [vmem:[%s298] sm:$0xf]
        %v345 = vld [vmem:[%s298 + $0x4] sm:$0xf]
        %v346 = vld [vmem:[#allocation5] sm:$0xff]
        %v347 = vld [vmem:[#allocation5 + $0x8] sm:$0xff]
        %v348 = vld [vmem:[#allocation5 + $0x10] sm:$0xff]
        %v349 = vld [vmem:[#allocation5 + $0x18] sm:$0xff]
        %v350 = vld [vmem:[#allocation5 + $0x20] sm:$0xff]
        %v351 = vld [vmem:[#allocation5 + $0x28] sm:$0xff]
        %v352 = vld [vmem:[#allocation5 + $0x30] sm:$0xff]
        %v353 = vld [vmem:[#allocation5 + $0x38] sm:$0xff]
        %v354 = vld [vmem:[#allocation5 + $0x40] sm:$0xff]
        %v355 = vld [vmem:[#allocation5 + $0x48] sm:$0xff]
        %v356 = vld [vmem:[#allocation5 + $0x50] sm:$0xff]
        %v357 = vld [vmem:[#allocation5 + $0x58] sm:$0xff]
        %v358 = vld [vmem:[#allocation5 + $0x60] sm:$0xff]
        %v359 = vld [vmem:[#allocation5 + $0x68] sm:$0xff]
        %v360 = vld [vmem:[#allocation5 + $0x70] sm:$0xff]
        %v361 = vld [vmem:[#allocation5 + $0x78] sm:$0xff]
        %v362 = vld [vmem:[#allocation5 + $0x80] sm:$0xff]
        %v363 = vld [vmem:[#allocation5 + $0x88] sm:$0xff]
        %v364 = vld [vmem:[#allocation5 + $0x90] sm:$0xff]
        %v365 = vld [vmem:[#allocation5 + $0x98] sm:$0xff]
        %v366 = vld [vmem:[#allocation5 + $0xa0] sm:$0xff]
        %v367 = vld [vmem:[#allocation5 + $0xa8] sm:$0xff]
        %v368 = vld [vmem:[#allocation5 + $0xb0] sm:$0xff]
        %v369 = vld [vmem:[#allocation5 + $0xb8] sm:$0xff]
        %v370 = vld [vmem:[#allocation5 + $0xc0] sm:$0xff]
        %v371 = vld [vmem:[#allocation5 + $0xc8] sm:$0xff]
        %v372 = vld [vmem:[#allocation5 + $0xd0] sm:$0xff]
        %v373 = vld [vmem:[#allocation5 + $0xd8] sm:$0xff]
        %v374 = vld [vmem:[#allocation5 + $0xe0] sm:$0xff]
        %v375 = vld [vmem:[#allocation5 + $0xe8] sm:$0xff]
        %v376 = vld [vmem:[#allocation5 + $0xf0] sm:$0xff]
        %v377 = vld [vmem:[#allocation5 + $0xf8] sm:$0xff]
        %v378 = vld [vmem:[%s2] sm:$0xf]
        %v380 = vlaneseq
        %v381 = vshrl.u32 %v380, 7
        %v382 = vsub.s32 0, %v381
        %v383 = vrot.slane %v378, %v382
        %v384 = vlaneseq
        %v385 = vshrl.u32 %v384, 7
        %v386 = vsub.s32 1, %v385
        %v387 = vrot.slane %v378, %v386
        %v388 = vlaneseq
        %v389 = vshrl.u32 %v388, 7
        %v390 = vsub.s32 2, %v389
        %v391 = vrot.slane %v378, %v390
        %v392 = vlaneseq
        %v393 = vshrl.u32 %v392, 7
        %v394 = vsub.s32 3, %v393
        %v395 = vrot.slane %v378, %v394
        %v402 = vunpack.c.l.b16 %v344
        %v403 = vunpack.c.l.b16 %v345
        %v404 = vpack.c.b16 %v403, %v402
        %v438 = vunpack.c.l.b16 %v346
        %v439 = vunpack.c.h.b16 %v346
        %v440 = vunpack.c.l.b16 %v347
        %v441 = vunpack.c.h.b16 %v347
        %v442 = vunpack.c.l.b16 %v348
        %v443 = vunpack.c.h.b16 %v348
        %v444 = vunpack.c.l.b16 %v349
        %v445 = vunpack.c.h.b16 %v349
        %v446 = vunpack.c.l.b16 %v350
        %v447 = vunpack.c.h.b16 %v350
        %v448 = vunpack.c.l.b16 %v351
        %v449 = vunpack.c.h.b16 %v351
        %v450 = vunpack.c.l.b16 %v352
        %v451 = vunpack.c.h.b16 %v352
        %v452 = vunpack.c.l.b16 %v353
        %v453 = vunpack.c.h.b16 %v353
        %v454 = vunpack.c.l.b16 %v354
        %v455 = vunpack.c.h.b16 %v354
        %v456 = vunpack.c.l.b16 %v355
        %v457 = vunpack.c.h.b16 %v355
        %v458 = vunpack.c.l.b16 %v356
        %v459 = vunpack.c.h.b16 %v356
        %v460 = vunpack.c.l.b16 %v357
        %v461 = vunpack.c.h.b16 %v357
        %v462 = vunpack.c.l.b16 %v358
        %v463 = vunpack.c.h.b16 %v358
        %v464 = vunpack.c.l.b16 %v359
        %v465 = vunpack.c.h.b16 %v359
        %v466 = vunpack.c.l.b16 %v360
        %v467 = vunpack.c.h.b16 %v360
        %v468 = vunpack.c.l.b16 %v361
        %v469 = vunpack.c.h.b16 %v361
        %v470 = vunpack.c.l.b16 %v362
        %v471 = vunpack.c.h.b16 %v362
        %v472 = vunpack.c.l.b16 %v363
        %v473 = vunpack.c.h.b16 %v363
        %v474 = vunpack.c.l.b16 %v364
        %v475 = vunpack.c.h.b16 %v364
        %v476 = vunpack.c.l.b16 %v365
        %v477 = vunpack.c.h.b16 %v365
        %v478 = vunpack.c.l.b16 %v366
        %v479 = vunpack.c.h.b16 %v366
        %v480 = vunpack.c.l.b16 %v367
        %v481 = vunpack.c.h.b16 %v367
        %v482 = vunpack.c.l.b16 %v368
        %v483 = vunpack.c.h.b16 %v368
        %v484 = vunpack.c.l.b16 %v369
        %v485 = vunpack.c.h.b16 %v369
        %v486 = vunpack.c.l.b16 %v370
        %v487 = vunpack.c.h.b16 %v370
        %v488 = vunpack.c.l.b16 %v371
        %v489 = vunpack.c.h.b16 %v371
        %v490 = vunpack.c.l.b16 %v372
        %v491 = vunpack.c.h.b16 %v372
        %v492 = vunpack.c.l.b16 %v373
        %v493 = vunpack.c.h.b16 %v373
        %v494 = vunpack.c.l.b16 %v374
        %v495 = vunpack.c.h.b16 %v374
        %v496 = vunpack.c.l.b16 %v375
        %v497 = vunpack.c.h.b16 %v375
        %v498 = vunpack.c.l.b16 %v376
        %v499 = vunpack.c.h.b16 %v376
        %v500 = vunpack.c.l.b16 %v377
        %v501 = vunpack.c.h.b16 %v377
        %v502 = vpack.c.b16 %v442, %v438
        %v503 = vpack.c.b16 %v443, %v439
        %v504 = vpack.c.b16 %v444, %v440
        %v505 = vpack.c.b16 %v445, %v441
        %v506 = vpack.c.b16 %v450, %v446
        %v507 = vpack.c.b16 %v451, %v447
        %v508 = vpack.c.b16 %v452, %v448
        %v509 = vpack.c.b16 %v453, %v449
        %v510 = vpack.c.b16 %v458, %v454
        %v511 = vpack.c.b16 %v459, %v455
        %v512 = vpack.c.b16 %v460, %v456
        %v513 = vpack.c.b16 %v461, %v457
        %v514 = vpack.c.b16 %v466, %v462
        %v515 = vpack.c.b16 %v467, %v463
        %v516 = vpack.c.b16 %v468, %v464
        %v517 = vpack.c.b16 %v469, %v465
        %v518 = vpack.c.b16 %v474, %v470
        %v519 = vpack.c.b16 %v475, %v471
        %v520 = vpack.c.b16 %v476, %v472
        %v521 = vpack.c.b16 %v477, %v473
        %v522 = vpack.c.b16 %v482, %v478
        %v523 = vpack.c.b16 %v483, %v479
        %v524 = vpack.c.b16 %v484, %v480
        %v525 = vpack.c.b16 %v485, %v481
        %v526 = vpack.c.b16 %v490, %v486
        %v527 = vpack.c.b16 %v491, %v487
        %v528 = vpack.c.b16 %v492, %v488
        %v529 = vpack.c.b16 %v493, %v489
        %v530 = vpack.c.b16 %v498, %v494
        %v531 = vpack.c.b16 %v499, %v495
        %v532 = vpack.c.b16 %v500, %v496
        %v533 = vpack.c.b16 %v501, %v497
        %566 = vmatprep.subr.bf16.mxu0 %v503
        %567 = vmatpush1.bf16.msra.mxu0 %v502
        %568 = vmatprep.subr.bf16.mxu0 %v507
        %569 = vmatpush1.bf16.msra.mxu0 %v506
        %570 = vmatprep.subr.bf16.mxu0 %v511
        %571 = vmatpush1.bf16.msra.mxu0 %v510
        %572 = vmatprep.subr.bf16.mxu0 %v515
        %573 = vmatpush1.bf16.msra.mxu0 %v514
        %574 = vmatprep.subr.bf16.mxu0 %v519
        %575 = vmatpush1.bf16.msra.mxu0 %v518
        %576 = vmatprep.subr.bf16.mxu0 %v523
        %577 = vmatpush1.bf16.msra.mxu0 %v522
        %578 = vmatprep.subr.bf16.mxu0 %v527
        %579 = vmatpush1.bf16.msra.mxu0 %v526
        %580 = vmatprep.subr.bf16.mxu0 %v531
        %581 = vmatpush1.bf16.msra.mxu0 %v530
        %582 = vmatprep.subr.bf16.mxu0 0
        %583 = vmatpush1.bf16.msra.mxu0 0
        %584 = vmatprep.subr.bf16.mxu0 0
        %585 = vmatpush1.bf16.msra.mxu0 0
        %586 = vmatprep.subr.bf16.mxu0 0
        %587 = vmatpush1.bf16.msra.mxu0 0
        %588 = vmatprep.subr.bf16.mxu0 0
        %589 = vmatpush1.bf16.msra.mxu0 0
        %590 = vmatprep.subr.bf16.mxu0 0
        %591 = vmatpush1.bf16.msra.mxu0 0
        %592 = vmatprep.subr.bf16.mxu0 0
        %593 = vmatpush1.bf16.msra.mxu0 0
        %594 = vmatprep.subr.bf16.mxu0 0
        %595 = vmatpush1.bf16.msra.mxu0 0
        %596 = vmatprep.subr.bf16.mxu0 0
        %597 = vmatpush1.bf16.msra.mxu0 0
        %598 = vmatprep.mubr.bf16.mxu0 0
        %599 = vmatmul.mubr.bf16.gmra.mrb[0].mxu0 %v404
        %v600 = vpop.f32.mrb[0].mxu0
        %v601 = vadd.f32 %v383, %v600
        %v602 = vpop.f32.mrb[0].mxu0
        %v603 = vadd.f32 %v387, %v602
        %v604 = vpop.f32.mrb[0].mxu0
        %v605 = vadd.f32 %v383, %v604
        %v606 = vpop.f32.mrb[0].mxu0
        %v607 = vadd.f32 %v387, %v606
        %608 = vdwg.mxu0
        %609 = vmatprep.subr.bf16.mxu0 %v505
        %610 = vmatpush1.bf16.msra.mxu0 %v504
        %611 = vmatprep.subr.bf16.mxu0 %v509
        %612 = vmatpush1.bf16.msra.mxu0 %v508
        %613 = vmatprep.subr.bf16.mxu0 %v513
        %614 = vmatpush1.bf16.msra.mxu0 %v512
        %615 = vmatprep.subr.bf16.mxu0 %v517
        %616 = vmatpush1.bf16.msra.mxu0 %v516
        %617 = vmatprep.subr.bf16.mxu0 %v521
        %618 = vmatpush1.bf16.msra.mxu0 %v520
        %619 = vmatprep.subr.bf16.mxu0 %v525
        %620 = vmatpush1.bf16.msra.mxu0 %v524
        %621 = vmatprep.subr.bf16.mxu0 %v529
        %622 = vmatpush1.bf16.msra.mxu0 %v528
        %623 = vmatprep.subr.bf16.mxu0 %v533
        %624 = vmatpush1.bf16.msra.mxu0 %v532
        %625 = vmatprep.subr.bf16.mxu0 0
        %626 = vmatpush1.bf16.msra.mxu0 0
        %627 = vmatprep.subr.bf16.mxu0 0
        %628 = vmatpush1.bf16.msra.mxu0 0
        %629 = vmatprep.subr.bf16.mxu0 0
        %630 = vmatpush1.bf16.msra.mxu0 0
        %631 = vmatprep.subr.bf16.mxu0 0
        %632 = vmatpush1.bf16.msra.mxu0 0
        %633 = vmatprep.subr.bf16.mxu0 0
        %634 = vmatpush1.bf16.msra.mxu0 0
        %635 = vmatprep.subr.bf16.mxu0 0
        %636 = vmatpush1.bf16.msra.mxu0 0
        %637 = vmatprep.subr.bf16.mxu0 0
        %638 = vmatpush1.bf16.msra.mxu0 0
        %639 = vmatprep.subr.bf16.mxu0 0
        %640 = vmatpush1.bf16.msra.mxu0 0
        %641 = vmatprep.mubr.bf16.mxu0 0
        %642 = vmatmul.mubr.bf16.gmra.mrb[0].mxu0 %v404
        %v643 = vpop.f32.mrb[0].mxu0
        %v644 = vadd.f32 %v391, %v643
        %v645 = vpop.f32.mrb[0].mxu0
        %v646 = vadd.f32 %v395, %v645
        %v647 = vpop.f32.mrb[0].mxu0
        %v648 = vadd.f32 %v391, %v647
        %v649 = vpop.f32.mrb[0].mxu0
        %v650 = vadd.f32 %v395, %v649
        %651 = vdwg.mxu0
        %v652 = vmax.f32 %v601, 0.0
        %v653 = vmax.f32 %v603, 0.0
        %v654 = vmax.f32 %v644, 0.0
        %v655 = vmax.f32 %v646, 0.0
        %v656 = vmax.f32 %v605, 0.0
        %v657 = vmax.f32 %v607, 0.0
        %v658 = vmax.f32 %v648, 0.0
        %v659 = vmax.f32 %v650, 0.0
        %v660 = vadd.f32 %v652, %v653
        %v661 = vadd.f32 %v660, %v654
        %v662 = vadd.f32 %v661, %v655
        %663 = vadd.xlane.f32.xlu0 %v662
        %v664 = vpop.xlane.xlu0 %663
        %v665 = vadd.f32 %v656, %v657
        %v666 = vadd.f32 %v665, %v658
        %v667 = vadd.f32 %v666, %v659
        %668 = vadd.xlane.f32.xlu0 %v667
        %v669 = vpop.xlane.xlu0 %668
        %v670 = vrcp.pop 512.0
        %v671 = vmul.f32 %v664, %v670
        %v672 = vmul.f32 %v669, %v670
        %v673 = vsub.f32 %v652, %v671
        %v674 = vsub.f32 %v653, %v671
        %v675 = vsub.f32 %v654, %v671
        %v676 = vsub.f32 %v655, %v671
        %v677 = vsub.f32 %v656, %v672
        %v678 = vsub.f32 %v657, %v672
        %v679 = vsub.f32 %v658, %v672
        %v680 = vsub.f32 %v659, %v672
        %v681 = vmul.f32 %v673, %v673
        %v682 = vmul.f32 %v674, %v674
        %v683 = vmul.f32 %v675, %v675
        %v684 = vmul.f32 %v676, %v676
        %v685 = vmul.f32 %v677, %v677
        %v686 = vmul.f32 %v678, %v678
        %v687 = vmul.f32 %v679, %v679
        %v688 = vmul.f32 %v680, %v680
        %v689 = vadd.f32 %v681, %v682
        %v690 = vadd.f32 %v689, %v683
        %v691 = vadd.f32 %v690, %v684
        %692 = vadd.xlane.f32.xlu0 %v691
        %v693 = vpop.xlane.xlu0 %692
        %v694 = vadd.f32 %v685, %v686
        %v695 = vadd.f32 %v694, %v687
        %v696 = vadd.f32 %v695, %v688
        %697 = vadd.xlane.f32.xlu0 %v696
        %v698 = vpop.xlane.xlu0 %697
        %v699 = vmul.f32 %v693, %v670
        %v700 = vmul.f32 %v698, %v670
        %v701 = vadd.f32 %v699, 1e-05
        %v702 = vadd.f32 %v700, 1e-05
        %v703 = vrsqrt.pop %v701
        %v704 = vrsqrt.pop %v702
        %v705 = vmul.f32 %v673, %v703
        %v706 = vmul.f32 %v674, %v703
        %v707 = vmul.f32 %v675, %v703
        %v708 = vmul.f32 %v676, %v703
        %v709 = vmul.f32 %v677, %v704
        %v710 = vmul.f32 %v678, %v704
        %v711 = vmul.f32 %v679, %v704
        %v712 = vmul.f32 %v680, %v704
        %v713 = vpack.c.bf16 %v709, %v705
        %v714 = vpack.c.bf16 %v710, %v706
        %v715 = vpack.c.bf16 %v711, %v707
        %v716 = vpack.c.bf16 %v712, %v708
        %v717 = vld [vmem:[#allocation7] sm:$0xff]
        %v718 = vld [vmem:[#allocation7 + $0x8] sm:$0xff]
        %v719 = vld [vmem:[#allocation7 + $0x10] sm:$0xff]
        %v720 = vld [vmem:[#allocation7 + $0x18] sm:$0xff]
        %v721 = vld [vmem:[#allocation7 + $0x20] sm:$0xff]
        %v722 = vld [vmem:[#allocation7 + $0x28] sm:$0xff]
        %v723 = vld [vmem:[#allocation7 + $0x30] sm:$0xff]
        %v724 = vld [vmem:[#allocation7 + $0x38] sm:$0xff]
        %v725 = vld [vmem:[#allocation7 + $0x40] sm:$0xff]
        %v726 = vld [vmem:[#allocation7 + $0x48] sm:$0xff]
        %v727 = vld [vmem:[#allocation7 + $0x50] sm:$0xff]
        %v728 = vld [vmem:[#allocation7 + $0x58] sm:$0xff]
        %v729 = vld [vmem:[#allocation7 + $0x60] sm:$0xff]
        %v730 = vld [vmem:[#allocation7 + $0x68] sm:$0xff]
        %v731 = vld [vmem:[#allocation7 + $0x70] sm:$0xff]
        %v732 = vld [vmem:[#allocation7 + $0x78] sm:$0xff]
        %v733 = vld [vmem:[#allocation7 + $0x80] sm:$0xff]
        %v734 = vld [vmem:[#allocation7 + $0x88] sm:$0xff]
        %v735 = vld [vmem:[#allocation7 + $0x90] sm:$0xff]
        %v736 = vld [vmem:[#allocation7 + $0x98] sm:$0xff]
        %v737 = vld [vmem:[#allocation7 + $0xa0] sm:$0xff]
        %v738 = vld [vmem:[#allocation7 + $0xa8] sm:$0xff]
        %v739 = vld [vmem:[#allocation7 + $0xb0] sm:$0xff]
        %v740 = vld [vmem:[#allocation7 + $0xb8] sm:$0xff]
        %v741 = vld [vmem:[#allocation7 + $0xc0] sm:$0xff]
        %v742 = vld [vmem:[#allocation7 + $0xc8] sm:$0xff]
        %v743 = vld [vmem:[#allocation7 + $0xd0] sm:$0xff]
        %v744 = vld [vmem:[#allocation7 + $0xd8] sm:$0xff]
        %v745 = vld [vmem:[#allocation7 + $0xe0] sm:$0xff]
        %v746 = vld [vmem:[#allocation7 + $0xe8] sm:$0xff]
        %v747 = vld [vmem:[#allocation7 + $0xf0] sm:$0xff]
        %v748 = vld [vmem:[#allocation7 + $0xf8] sm:$0xff]
        %v749 = vld [vmem:[#allocation7 + $0x100] sm:$0xff]
        %v750 = vld [vmem:[#allocation7 + $0x108] sm:$0xff]
        %v751 = vld [vmem:[#allocation7 + $0x110] sm:$0xff]
        %v752 = vld [vmem:[#allocation7 + $0x118] sm:$0xff]
        %v753 = vld [vmem:[#allocation7 + $0x120] sm:$0xff]
        %v754 = vld [vmem:[#allocation7 + $0x128] sm:$0xff]
        %v755 = vld [vmem:[#allocation7 + $0x130] sm:$0xff]
        %v756 = vld [vmem:[#allocation7 + $0x138] sm:$0xff]
        %v757 = vld [vmem:[#allocation7 + $0x140] sm:$0xff]
        %v758 = vld [vmem:[#allocation7 + $0x148] sm:$0xff]
        %v759 = vld [vmem:[#allocation7 + $0x150] sm:$0xff]
        %v760 = vld [vmem:[#allocation7 + $0x158] sm:$0xff]
        %v761 = vld [vmem:[#allocation7 + $0x160] sm:$0xff]
        %v762 = vld [vmem:[#allocation7 + $0x168] sm:$0xff]
        %v763 = vld [vmem:[#allocation7 + $0x170] sm:$0xff]
        %v764 = vld [vmem:[#allocation7 + $0x178] sm:$0xff]
        %v765 = vld [vmem:[#allocation7 + $0x180] sm:$0xff]
        %v766 = vld [vmem:[#allocation7 + $0x188] sm:$0xff]
        %v767 = vld [vmem:[#allocation7 + $0x190] sm:$0xff]
        %v768 = vld [vmem:[#allocation7 + $0x198] sm:$0xff]
        %v769 = vld [vmem:[#allocation7 + $0x1a0] sm:$0xff]
        %v770 = vld [vmem:[#allocation7 + $0x1a8] sm:$0xff]
        %v771 = vld [vmem:[#allocation7 + $0x1b0] sm:$0xff]
        %v772 = vld [vmem:[#allocation7 + $0x1b8] sm:$0xff]
        %v773 = vld [vmem:[#allocation7 + $0x1c0] sm:$0xff]
        %v774 = vld [vmem:[#allocation7 + $0x1c8] sm:$0xff]
        %v775 = vld [vmem:[#allocation7 + $0x1d0] sm:$0xff]
        %v776 = vld [vmem:[#allocation7 + $0x1d8] sm:$0xff]
        %v777 = vld [vmem:[#allocation7 + $0x1e0] sm:$0xff]
        %v778 = vld [vmem:[#allocation7 + $0x1e8] sm:$0xff]
        %v779 = vld [vmem:[#allocation7 + $0x1f0] sm:$0xff]
        %v780 = vld [vmem:[#allocation7 + $0x1f8] sm:$0xff]
        %v781 = vld [vmem:[#allocation7 + $0x200] sm:$0xff]
        %v782 = vld [vmem:[#allocation7 + $0x208] sm:$0xff]
        %v783 = vld [vmem:[#allocation7 + $0x210] sm:$0xff]
        %v784 = vld [vmem:[#allocation7 + $0x218] sm:$0xff]
        %v785 = vld [vmem:[#allocation7 + $0x220] sm:$0xff]
        %v786 = vld [vmem:[#allocation7 + $0x228] sm:$0xff]
        %v787 = vld [vmem:[#allocation7 + $0x230] sm:$0xff]
        %v788 = vld [vmem:[#allocation7 + $0x238] sm:$0xff]
        %v789 = vld [vmem:[#allocation7 + $0x240] sm:$0xff]
        %v790 = vld [vmem:[#allocation7 + $0x248] sm:$0xff]
        %v791 = vld [vmem:[#allocation7 + $0x250] sm:$0xff]
        %v792 = vld [vmem:[#allocation7 + $0x258] sm:$0xff]
        %v793 = vld [vmem:[#allocation7 + $0x260] sm:$0xff]
        %v794 = vld [vmem:[#allocation7 + $0x268] sm:$0xff]
        %v795 = vld [vmem:[#allocation7 + $0x270] sm:$0xff]
        %v796 = vld [vmem:[#allocation7 + $0x278] sm:$0xff]
        %v797 = vld [vmem:[#allocation7 + $0x280] sm:$0xff]
        %v798 = vld [vmem:[#allocation7 + $0x288] sm:$0xff]
        %v799 = vld [vmem:[#allocation7 + $0x290] sm:$0xff]
        %v800 = vld [vmem:[#allocation7 + $0x298] sm:$0xff]
        %v801 = vld [vmem:[#allocation7 + $0x2a0] sm:$0xff]
        %v802 = vld [vmem:[#allocation7 + $0x2a8] sm:$0xff]
        %v803 = vld [vmem:[#allocation7 + $0x2b0] sm:$0xff]
        %v804 = vld [vmem:[#allocation7 + $0x2b8] sm:$0xff]
        %v805 = vld [vmem:[#allocation7 + $0x2c0] sm:$0xff]
        %v806 = vld [vmem:[#allocation7 + $0x2c8] sm:$0xff]
        %v807 = vld [vmem:[#allocation7 + $0x2d0] sm:$0xff]
        %v808 = vld [vmem:[#allocation7 + $0x2d8] sm:$0xff]
        %v809 = vld [vmem:[#allocation7 + $0x2e0] sm:$0xff]
        %v810 = vld [vmem:[#allocation7 + $0x2e8] sm:$0xff]
        %v811 = vld [vmem:[#allocation7 + $0x2f0] sm:$0xff]
        %v812 = vld [vmem:[#allocation7 + $0x2f8] sm:$0xff]
        %v813 = vld [vmem:[#allocation7 + $0x300] sm:$0xff]
        %v814 = vld [vmem:[#allocation7 + $0x308] sm:$0xff]
        %v815 = vld [vmem:[#allocation7 + $0x310] sm:$0xff]
        %v816 = vld [vmem:[#allocation7 + $0x318] sm:$0xff]
        %v817 = vld [vmem:[#allocation7 + $0x320] sm:$0xff]
        %v818 = vld [vmem:[#allocation7 + $0x328] sm:$0xff]
        %v819 = vld [vmem:[#allocation7 + $0x330] sm:$0xff]
        %v820 = vld [vmem:[#allocation7 + $0x338] sm:$0xff]
        %v821 = vld [vmem:[#allocation7 + $0x340] sm:$0xff]
        %v822 = vld [vmem:[#allocation7 + $0x348] sm:$0xff]
        %v823 = vld [vmem:[#allocation7 + $0x350] sm:$0xff]
        %v824 = vld [vmem:[#allocation7 + $0x358] sm:$0xff]
        %v825 = vld [vmem:[#allocation7 + $0x360] sm:$0xff]
        %v826 = vld [vmem:[#allocation7 + $0x368] sm:$0xff]
        %v827 = vld [vmem:[#allocation7 + $0x370] sm:$0xff]
        %v828 = vld [vmem:[#allocation7 + $0x378] sm:$0xff]
        %v829 = vld [vmem:[#allocation7 + $0x380] sm:$0xff]
        %v830 = vld [vmem:[#allocation7 + $0x388] sm:$0xff]
        %v831 = vld [vmem:[#allocation7 + $0x390] sm:$0xff]
        %v832 = vld [vmem:[#allocation7 + $0x398] sm:$0xff]
        %v833 = vld [vmem:[#allocation7 + $0x3a0] sm:$0xff]
        %v834 = vld [vmem:[#allocation7 + $0x3a8] sm:$0xff]
        %v835 = vld [vmem:[#allocation7 + $0x3b0] sm:$0xff]
        %v836 = vld [vmem:[#allocation7 + $0x3b8] sm:$0xff]
        %v837 = vld [vmem:[#allocation7 + $0x3c0] sm:$0xff]
        %v838 = vld [vmem:[#allocation7 + $0x3c8] sm:$0xff]
        %v839 = vld [vmem:[#allocation7 + $0x3d0] sm:$0xff]
        %v840 = vld [vmem:[#allocation7 + $0x3d8] sm:$0xff]
        %v841 = vld [vmem:[#allocation7 + $0x3e0] sm:$0xff]
        %v842 = vld [vmem:[#allocation7 + $0x3e8] sm:$0xff]
        %v843 = vld [vmem:[#allocation7 + $0x3f0] sm:$0xff]
        %v844 = vld [vmem:[#allocation7 + $0x3f8] sm:$0xff]
        %v845 = vld [vmem:[%s4] sm:$0xf]
        %v847 = vlaneseq
        %v848 = vshrl.u32 %v847, 7
        %v849 = vsub.s32 0, %v848
        %v850 = vrot.slane %v845, %v849
        %v851 = vlaneseq
        %v852 = vshrl.u32 %v851, 7
        %v853 = vsub.s32 1, %v852
        %v854 = vrot.slane %v845, %v853
        %v855 = vlaneseq
        %v856 = vshrl.u32 %v855, 7
        %v857 = vsub.s32 2, %v856
        %v858 = vrot.slane %v845, %v857
        %v859 = vlaneseq
        %v860 = vshrl.u32 %v859, 7
        %v861 = vsub.s32 3, %v860
        %v862 = vrot.slane %v845, %v861
        %v995 = vunpack.c.l.b16 %v717
        %v996 = vunpack.c.h.b16 %v717
        %v997 = vunpack.c.l.b16 %v718
        %v998 = vunpack.c.h.b16 %v718
        %v999 = vunpack.c.l.b16 %v719
        %v1000 = vunpack.c.h.b16 %v719
        %v1001 = vunpack.c.l.b16 %v720
        %v1002 = vunpack.c.h.b16 %v720
        %v1003 = vunpack.c.l.b16 %v721
        %v1004 = vunpack.c.h.b16 %v721
        %v1005 = vunpack.c.l.b16 %v722
        %v1006 = vunpack.c.h.b16 %v722
        %v1007 = vunpack.c.l.b16 %v723
        %v1008 = vunpack.c.h.b16 %v723
        %v1009 = vunpack.c.l.b16 %v724
        %v1010 = vunpack.c.h.b16 %v724
        %v1011 = vunpack.c.l.b16 %v725
        %v1012 = vunpack.c.h.b16 %v725
        %v1013 = vunpack.c.l.b16 %v726
        %v1014 = vunpack.c.h.b16 %v726
        %v1015 = vunpack.c.l.b16 %v727
        %v1016 = vunpack.c.h.b16 %v727
        %v1017 = vunpack.c.l.b16 %v728
        %v1018 = vunpack.c.h.b16 %v728
        %v1019 = vunpack.c.l.b16 %v729
        %v1020 = vunpack.c.h.b16 %v729
        %v1021 = vunpack.c.l.b16 %v730
        %v1022 = vunpack.c.h.b16 %v730
        %v1023 = vunpack.c.l.b16 %v731
        %v1024 = vunpack.c.h.b16 %v731
        %v1025 = vunpack.c.l.b16 %v732
        %v1026 = vunpack.c.h.b16 %v732
        %v1027 = vunpack.c.l.b16 %v733
        %v1028 = vunpack.c.h.b16 %v733
        %v1029 = vunpack.c.l.b16 %v734
        %v1030 = vunpack.c.h.b16 %v734
        %v1031 = vunpack.c.l.b16 %v735
        %v1032 = vunpack.c.h.b16 %v735
        %v1033 = vunpack.c.l.b16 %v736
        %v1034 = vunpack.c.h.b16 %v736
        %v1035 = vunpack.c.l.b16 %v737
        %v1036 = vunpack.c.h.b16 %v737
        %v1037 = vunpack.c.l.b16 %v738
        %v1038 = vunpack.c.h.b16 %v738
        %v1039 = vunpack.c.l.b16 %v739
        %v1040 = vunpack.c.h.b16 %v739
        %v1041 = vunpack.c.l.b16 %v740
        %v1042 = vunpack.c.h.b16 %v740
        %v1043 = vunpack.c.l.b16 %v741
        %v1044 = vunpack.c.h.b16 %v741
        %v1045 = vunpack.c.l.b16 %v742
        %v1046 = vunpack.c.h.b16 %v742
        %v1047 = vunpack.c.l.b16 %v743
        %v1048 = vunpack.c.h.b16 %v743
        %v1049 = vunpack.c.l.b16 %v744
        %v1050 = vunpack.c.h.b16 %v744
        %v1051 = vunpack.c.l.b16 %v745
        %v1052 = vunpack.c.h.b16 %v745
        %v1053 = vunpack.c.l.b16 %v746
        %v1054 = vunpack.c.h.b16 %v746
        %v1055 = vunpack.c.l.b16 %v747
        %v1056 = vunpack.c.h.b16 %v747
        %v1057 = vunpack.c.l.b16 %v748
        %v1058 = vunpack.c.h.b16 %v748
        %v1059 = vunpack.c.l.b16 %v749
        %v1060 = vunpack.c.h.b16 %v749
        %v1061 = vunpack.c.l.b16 %v750
        %v1062 = vunpack.c.h.b16 %v750
        %v1063 = vunpack.c.l.b16 %v751
        %v1064 = vunpack.c.h.b16 %v751
        %v1065 = vunpack.c.l.b16 %v752
        %v1066 = vunpack.c.h.b16 %v752
        %v1067 = vunpack.c.l.b16 %v753
        %v1068 = vunpack.c.h.b16 %v753
        %v1069 = vunpack.c.l.b16 %v754
        %v1070 = vunpack.c.h.b16 %v754
        %v1071 = vunpack.c.l.b16 %v755
        %v1072 = vunpack.c.h.b16 %v755
        %v1073 = vunpack.c.l.b16 %v756
        %v1074 = vunpack.c.h.b16 %v756
        %v1075 = vunpack.c.l.b16 %v757
        %v1076 = vunpack.c.h.b16 %v757
        %v1077 = vunpack.c.l.b16 %v758
        %v1078 = vunpack.c.h.b16 %v758
        %v1079 = vunpack.c.l.b16 %v759
        %v1080 = vunpack.c.h.b16 %v759
        %v1081 = vunpack.c.l.b16 %v760
        %v1082 = vunpack.c.h.b16 %v760
        %v1083 = vunpack.c.l.b16 %v761
        %v1084 = vunpack.c.h.b16 %v761
        %v1085 = vunpack.c.l.b16 %v762
        %v1086 = vunpack.c.h.b16 %v762
        %v1087 = vunpack.c.l.b16 %v763
        %v1088 = vunpack.c.h.b16 %v763
        %v1089 = vunpack.c.l.b16 %v764
        %v1090 = vunpack.c.h.b16 %v764
        %v1091 = vunpack.c.l.b16 %v765
        %v1092 = vunpack.c.h.b16 %v765
        %v1093 = vunpack.c.l.b16 %v766
        %v1094 = vunpack.c.h.b16 %v766
        %v1095 = vunpack.c.l.b16 %v767
        %v1096 = vunpack.c.h.b16 %v767
        %v1097 = vunpack.c.l.b16 %v768
        %v1098 = vunpack.c.h.b16 %v768
        %v1099 = vunpack.c.l.b16 %v769
        %v1100 = vunpack.c.h.b16 %v769
        %v1101 = vunpack.c.l.b16 %v770
        %v1102 = vunpack.c.h.b16 %v770
        %v1103 = vunpack.c.l.b16 %v771
        %v1104 = vunpack.c.h.b16 %v771
        %v1105 = vunpack.c.l.b16 %v772
        %v1106 = vunpack.c.h.b16 %v772
        %v1107 = vunpack.c.l.b16 %v773
        %v1108 = vunpack.c.h.b16 %v773
        %v1109 = vunpack.c.l.b16 %v774
        %v1110 = vunpack.c.h.b16 %v774
        %v1111 = vunpack.c.l.b16 %v775
        %v1112 = vunpack.c.h.b16 %v775
        %v1113 = vunpack.c.l.b16 %v776
        %v1114 = vunpack.c.h.b16 %v776
        %v1115 = vunpack.c.l.b16 %v777
        %v1116 = vunpack.c.h.b16 %v777
        %v1117 = vunpack.c.l.b16 %v778
        %v1118 = vunpack.c.h.b16 %v778
        %v1119 = vunpack.c.l.b16 %v779
        %v1120 = vunpack.c.h.b16 %v779
        %v1121 = vunpack.c.l.b16 %v780
        %v1122 = vunpack.c.h.b16 %v780
        %v1123 = vunpack.c.l.b16 %v781
        %v1124 = vunpack.c.h.b16 %v781
        %v1125 = vunpack.c.l.b16 %v782
        %v1126 = vunpack.c.h.b16 %v782
        %v1127 = vunpack.c.l.b16 %v783
        %v1128 = vunpack.c.h.b16 %v783
        %v1129 = vunpack.c.l.b16 %v784
        %v1130 = vunpack.c.h.b16 %v784
        %v1131 = vunpack.c.l.b16 %v785
        %v1132 = vunpack.c.h.b16 %v785
        %v1133 = vunpack.c.l.b16 %v786
        %v1134 = vunpack.c.h.b16 %v786
        %v1135 = vunpack.c.l.b16 %v787
        %v1136 = vunpack.c.h.b16 %v787
        %v1137 = vunpack.c.l.b16 %v788
        %v1138 = vunpack.c.h.b16 %v788
        %v1139 = vunpack.c.l.b16 %v789
        %v1140 = vunpack.c.h.b16 %v789
        %v1141 = vunpack.c.l.b16 %v790
        %v1142 = vunpack.c.h.b16 %v790
        %v1143 = vunpack.c.l.b16 %v791
        %v1144 = vunpack.c.h.b16 %v791
        %v1145 = vunpack.c.l.b16 %v792
        %v1146 = vunpack.c.h.b16 %v792
        %v1147 = vunpack.c.l.b16 %v793
        %v1148 = vunpack.c.h.b16 %v793
        %v1149 = vunpack.c.l.b16 %v794
        %v1150 = vunpack.c.h.b16 %v794
        %v1151 = vunpack.c.l.b16 %v795
        %v1152 = vunpack.c.h.b16 %v795
        %v1153 = vunpack.c.l.b16 %v796
        %v1154 = vunpack.c.h.b16 %v796
        %v1155 = vunpack.c.l.b16 %v797
        %v1156 = vunpack.c.h.b16 %v797
        %v1157 = vunpack.c.l.b16 %v798
        %v1158 = vunpack.c.h.b16 %v798
        %v1159 = vunpack.c.l.b16 %v799
        %v1160 = vunpack.c.h.b16 %v799
        %v1161 = vunpack.c.l.b16 %v800
        %v1162 = vunpack.c.h.b16 %v800
        %v1163 = vunpack.c.l.b16 %v801
        %v1164 = vunpack.c.h.b16 %v801
        %v1165 = vunpack.c.l.b16 %v802
        %v1166 = vunpack.c.h.b16 %v802
        %v1167 = vunpack.c.l.b16 %v803
        %v1168 = vunpack.c.h.b16 %v803
        %v1169 = vunpack.c.l.b16 %v804
        %v1170 = vunpack.c.h.b16 %v804
        %v1171 = vunpack.c.l.b16 %v805
        %v1172 = vunpack.c.h.b16 %v805
        %v1173 = vunpack.c.l.b16 %v806
        %v1174 = vunpack.c.h.b16 %v806
        %v1175 = vunpack.c.l.b16 %v807
        %v1176 = vunpack.c.h.b16 %v807
        %v1177 = vunpack.c.l.b16 %v808
        %v1178 = vunpack.c.h.b16 %v808
        %v1179 = vunpack.c.l.b16 %v809
        %v1180 = vunpack.c.h.b16 %v809
        %v1181 = vunpack.c.l.b16 %v810
        %v1182 = vunpack.c.h.b16 %v810
        %v1183 = vunpack.c.l.b16 %v811
        %v1184 = vunpack.c.h.b16 %v811
        %v1185 = vunpack.c.l.b16 %v812
        %v1186 = vunpack.c.h.b16 %v812
        %v1187 = vunpack.c.l.b16 %v813
        %v1188 = vunpack.c.h.b16 %v813
        %v1189 = vunpack.c.l.b16 %v814
        %v1190 = vunpack.c.h.b16 %v814
        %v1191 = vunpack.c.l.b16 %v815
        %v1192 = vunpack.c.h.b16 %v815
        %v1193 = vunpack.c.l.b16 %v816
        %v1194 = vunpack.c.h.b16 %v816
        %v1195 = vunpack.c.l.b16 %v817
        %v1196 = vunpack.c.h.b16 %v817
        %v1197 = vunpack.c.l.b16 %v818
        %v1198 = vunpack.c.h.b16 %v818
        %v1199 = vunpack.c.l.b16 %v819
        %v1200 = vunpack.c.h.b16 %v819
        %v1201 = vunpack.c.l.b16 %v820
        %v1202 = vunpack.c.h.b16 %v820
        %v1203 = vunpack.c.l.b16 %v821
        %v1204 = vunpack.c.h.b16 %v821
        %v1205 = vunpack.c.l.b16 %v822
        %v1206 = vunpack.c.h.b16 %v822
        %v1207 = vunpack.c.l.b16 %v823
        %v1208 = vunpack.c.h.b16 %v823
        %v1209 = vunpack.c.l.b16 %v824
        %v1210 = vunpack.c.h.b16 %v824
        %v1211 = vunpack.c.l.b16 %v825
        %v1212 = vunpack.c.h.b16 %v825
        %v1213 = vunpack.c.l.b16 %v826
        %v1214 = vunpack.c.h.b16 %v826
        %v1215 = vunpack.c.l.b16 %v827
        %v1216 = vunpack.c.h.b16 %v827
        %v1217 = vunpack.c.l.b16 %v828
        %v1218 = vunpack.c.h.b16 %v828
        %v1219 = vunpack.c.l.b16 %v829
        %v1220 = vunpack.c.h.b16 %v829
        %v1221 = vunpack.c.l.b16 %v830
        %v1222 = vunpack.c.h.b16 %v830
        %v1223 = vunpack.c.l.b16 %v831
        %v1224 = vunpack.c.h.b16 %v831
        %v1225 = vunpack.c.l.b16 %v832
        %v1226 = vunpack.c.h.b16 %v832
        %v1227 = vunpack.c.l.b16 %v833
        %v1228 = vunpack.c.h.b16 %v833
        %v1229 = vunpack.c.l.b16 %v834
        %v1230 = vunpack.c.h.b16 %v834
        %v1231 = vunpack.c.l.b16 %v835
        %v1232 = vunpack.c.h.b16 %v835
        %v1233 = vunpack.c.l.b16 %v836
        %v1234 = vunpack.c.h.b16 %v836
        %v1235 = vunpack.c.l.b16 %v837
        %v1236 = vunpack.c.h.b16 %v837
        %v1237 = vunpack.c.l.b16 %v838
        %v1238 = vunpack.c.h.b16 %v838
        %v1239 = vunpack.c.l.b16 %v839
        %v1240 = vunpack.c.h.b16 %v839
        %v1241 = vunpack.c.l.b16 %v840
        %v1242 = vunpack.c.h.b16 %v840
        %v1243 = vunpack.c.l.b16 %v841
        %v1244 = vunpack.c.h.b16 %v841
        %v1245 = vunpack.c.l.b16 %v842
        %v1246 = vunpack.c.h.b16 %v842
        %v1247 = vunpack.c.l.b16 %v843
        %v1248 = vunpack.c.h.b16 %v843
        %v1249 = vunpack.c.l.b16 %v844
        %v1250 = vunpack.c.h.b16 %v844
        %v1251 = vpack.c.b16 %v999, %v995
        %v1252 = vpack.c.b16 %v1000, %v996
        %v1253 = vpack.c.b16 %v1001, %v997
        %v1254 = vpack.c.b16 %v1002, %v998
        %v1255 = vpack.c.b16 %v1007, %v1003
        %v1256 = vpack.c.b16 %v1008, %v1004
        %v1257 = vpack.c.b16 %v1009, %v1005
        %v1258 = vpack.c.b16 %v1010, %v1006
        %v1259 = vpack.c.b16 %v1015, %v1011
        %v1260 = vpack.c.b16 %v1016, %v1012
        %v1261 = vpack.c.b16 %v1017, %v1013
        %v1262 = vpack.c.b16 %v1018, %v1014
        %v1263 = vpack.c.b16 %v1023, %v1019
        %v1264 = vpack.c.b16 %v1024, %v1020
        %v1265 = vpack.c.b16 %v1025, %v1021
        %v1266 = vpack.c.b16 %v1026, %v1022
        %v1267 = vpack.c.b16 %v1031, %v1027
        %v1268 = vpack.c.b16 %v1032, %v1028
        %v1269 = vpack.c.b16 %v1033, %v1029
        %v1270 = vpack.c.b16 %v1034, %v1030
        %v1271 = vpack.c.b16 %v1039, %v1035
        %v1272 = vpack.c.b16 %v1040, %v1036
        %v1273 = vpack.c.b16 %v1041, %v1037
        %v1274 = vpack.c.b16 %v1042, %v1038
        %v1275 = vpack.c.b16 %v1047, %v1043
        %v1276 = vpack.c.b16 %v1048, %v1044
        %v1277 = vpack.c.b16 %v1049, %v1045
        %v1278 = vpack.c.b16 %v1050, %v1046
        %v1279 = vpack.c.b16 %v1055, %v1051
        %v1280 = vpack.c.b16 %v1056, %v1052
        %v1281 = vpack.c.b16 %v1057, %v1053
        %v1282 = vpack.c.b16 %v1058, %v1054
        %v1283 = vpack.c.b16 %v1063, %v1059
        %v1284 = vpack.c.b16 %v1064, %v1060
        %v1285 = vpack.c.b16 %v1065, %v1061
        %v1286 = vpack.c.b16 %v1066, %v1062
        %v1287 = vpack.c.b16 %v1071, %v1067
        %v1288 = vpack.c.b16 %v1072, %v1068
        %v1289 = vpack.c.b16 %v1073, %v1069
        %v1290 = vpack.c.b16 %v1074, %v1070
        %v1291 = vpack.c.b16 %v1079, %v1075
        %v1292 = vpack.c.b16 %v1080, %v1076
        %v1293 = vpack.c.b16 %v1081, %v1077
        %v1294 = vpack.c.b16 %v1082, %v1078
        %v1295 = vpack.c.b16 %v1087, %v1083
        %v1296 = vpack.c.b16 %v1088, %v1084
        %v1297 = vpack.c.b16 %v1089, %v1085
        %v1298 = vpack.c.b16 %v1090, %v1086
        %v1299 = vpack.c.b16 %v1095, %v1091
        %v1300 = vpack.c.b16 %v1096, %v1092
        %v1301 = vpack.c.b16 %v1097, %v1093
        %v1302 = vpack.c.b16 %v1098, %v1094
        %v1303 = vpack.c.b16 %v1103, %v1099
        %v1304 = vpack.c.b16 %v1104, %v1100
        %v1305 = vpack.c.b16 %v1105, %v1101
        %v1306 = vpack.c.b16 %v1106, %v1102
        %v1307 = vpack.c.b16 %v1111, %v1107
        %v1308 = vpack.c.b16 %v1112, %v1108
        %v1309 = vpack.c.b16 %v1113, %v1109
        %v1310 = vpack.c.b16 %v1114, %v1110
        %v1311 = vpack.c.b16 %v1119, %v1115
        %v1312 = vpack.c.b16 %v1120, %v1116
        %v1313 = vpack.c.b16 %v1121, %v1117
        %v1314 = vpack.c.b16 %v1122, %v1118
        %v1315 = vpack.c.b16 %v1127, %v1123
        %v1316 = vpack.c.b16 %v1128, %v1124
        %v1317 = vpack.c.b16 %v1129, %v1125
        %v1318 = vpack.c.b16 %v1130, %v1126
        %v1319 = vpack.c.b16 %v1135, %v1131
        %v1320 = vpack.c.b16 %v1136, %v1132
        %v1321 = vpack.c.b16 %v1137, %v1133
        %v1322 = vpack.c.b16 %v1138, %v1134
        %v1323 = vpack.c.b16 %v1143, %v1139
        %v1324 = vpack.c.b16 %v1144, %v1140
        %v1325 = vpack.c.b16 %v1145, %v1141
        %v1326 = vpack.c.b16 %v1146, %v1142
        %v1327 = vpack.c.b16 %v1151, %v1147
        %v1328 = vpack.c.b16 %v1152, %v1148
        %v1329 = vpack.c.b16 %v1153, %v1149
        %v1330 = vpack.c.b16 %v1154, %v1150
        %v1331 = vpack.c.b16 %v1159, %v1155
        %v1332 = vpack.c.b16 %v1160, %v1156
        %v1333 = vpack.c.b16 %v1161, %v1157
        %v1334 = vpack.c.b16 %v1162, %v1158
        %v1335 = vpack.c.b16 %v1167, %v1163
        %v1336 = vpack.c.b16 %v1168, %v1164
        %v1337 = vpack.c.b16 %v1169, %v1165
        %v1338 = vpack.c.b16 %v1170, %v1166
        %v1339 = vpack.c.b16 %v1175, %v1171
        %v1340 = vpack.c.b16 %v1176, %v1172
        %v1341 = vpack.c.b16 %v1177, %v1173
        %v1342 = vpack.c.b16 %v1178, %v1174
        %v1343 = vpack.c.b16 %v1183, %v1179
        %v1344 = vpack.c.b16 %v1184, %v1180
        %v1345 = vpack.c.b16 %v1185, %v1181
        %v1346 = vpack.c.b16 %v1186, %v1182
        %v1347 = vpack.c.b16 %v1191, %v1187
        %v1348 = vpack.c.b16 %v1192, %v1188
        %v1349 = vpack.c.b16 %v1193, %v1189
        %v1350 = vpack.c.b16 %v1194, %v1190
        %v1351 = vpack.c.b16 %v1199, %v1195
        %v1352 = vpack.c.b16 %v1200, %v1196
        %v1353 = vpack.c.b16 %v1201, %v1197
        %v1354 = vpack.c.b16 %v1202, %v1198
        %v1355 = vpack.c.b16 %v1207, %v1203
        %v1356 = vpack.c.b16 %v1208, %v1204
        %v1357 = vpack.c.b16 %v1209, %v1205
        %v1358 = vpack.c.b16 %v1210, %v1206
        %v1359 = vpack.c.b16 %v1215, %v1211
        %v1360 = vpack.c.b16 %v1216, %v1212
        %v1361 = vpack.c.b16 %v1217, %v1213
        %v1362 = vpack.c.b16 %v1218, %v1214
        %v1363 = vpack.c.b16 %v1223, %v1219
        %v1364 = vpack.c.b16 %v1224, %v1220
        %v1365 = vpack.c.b16 %v1225, %v1221
        %v1366 = vpack.c.b16 %v1226, %v1222
        %v1367 = vpack.c.b16 %v1231, %v1227
        %v1368 = vpack.c.b16 %v1232, %v1228
        %v1369 = vpack.c.b16 %v1233, %v1229
        %v1370 = vpack.c.b16 %v1234, %v1230
        %v1371 = vpack.c.b16 %v1239, %v1235
        %v1372 = vpack.c.b16 %v1240, %v1236
        %v1373 = vpack.c.b16 %v1241, %v1237
        %v1374 = vpack.c.b16 %v1242, %v1238
        %v1375 = vpack.c.b16 %v1247, %v1243
        %v1376 = vpack.c.b16 %v1248, %v1244
        %v1377 = vpack.c.b16 %v1249, %v1245
        %v1378 = vpack.c.b16 %v1250, %v1246
        %1507 = vmatprep.subr.bf16.mxu0 %v1252
        %1508 = vmatpush1.bf16.msra.mxu0 %v1251
        %1509 = vmatprep.subr.bf16.mxu0 %v1256
        %1510 = vmatpush1.bf16.msra.mxu0 %v1255
        %1511 = vmatprep.subr.bf16.mxu0 %v1260
        %1512 = vmatpush1.bf16.msra.mxu0 %v1259
        %1513 = vmatprep.subr.bf16.mxu0 %v1264
        %1514 = vmatpush1.bf16.msra.mxu0 %v1263
        %1515 = vmatprep.subr.bf16.mxu0 %v1268
        %1516 = vmatpush1.bf16.msra.mxu0 %v1267
        %1517 = vmatprep.subr.bf16.mxu0 %v1272
        %1518 = vmatpush1.bf16.msra.mxu0 %v1271
        %1519 = vmatprep.subr.bf16.mxu0 %v1276
        %1520 = vmatpush1.bf16.msra.mxu0 %v1275
        %1521 = vmatprep.subr.bf16.mxu0 %v1280
        %1522 = vmatpush1.bf16.msra.mxu0 %v1279
        %1523 = vmatprep.subr.bf16.mxu0 %v1284
        %1524 = vmatpush1.bf16.msra.mxu0 %v1283
        %1525 = vmatprep.subr.bf16.mxu0 %v1288
        %1526 = vmatpush1.bf16.msra.mxu0 %v1287
        %1527 = vmatprep.subr.bf16.mxu0 %v1292
        %1528 = vmatpush1.bf16.msra.mxu0 %v1291
        %1529 = vmatprep.subr.bf16.mxu0 %v1296
        %1530 = vmatpush1.bf16.msra.mxu0 %v1295
        %1531 = vmatprep.subr.bf16.mxu0 %v1300
        %1532 = vmatpush1.bf16.msra.mxu0 %v1299
        %1533 = vmatprep.subr.bf16.mxu0 %v1304
        %1534 = vmatpush1.bf16.msra.mxu0 %v1303
        %1535 = vmatprep.subr.bf16.mxu0 %v1308
        %1536 = vmatpush1.bf16.msra.mxu0 %v1307
        %1537 = vmatprep.subr.bf16.mxu0 %v1312
        %1538 = vmatpush1.bf16.msra.mxu0 %v1311
        %1539 = vmatprep.mubr.bf16.mxu0 %v714
        %1540 = vmatmul.mubr.bf16.gmra.mrb[0].mxu0 %v713
        %v1541 = vpop.f32.mrb[0].mxu0
        %v1542 = vadd.f32 %v850, %v1541
        %v1543 = vpop.f32.mrb[0].mxu0
        %v1544 = vadd.f32 %v854, %v1543
        %v1545 = vpop.f32.mrb[0].mxu0
        %v1546 = vadd.f32 %v850, %v1545
        %v1547 = vpop.f32.mrb[0].mxu0
        %v1548 = vadd.f32 %v854, %v1547
        %1549 = vdwg.mxu0
        %1550 = vmatprep.subr.bf16.mxu0 %v1316
        %1551 = vmatpush1.bf16.msra.mxu0 %v1315
        %1552 = vmatprep.subr.bf16.mxu0 %v1320
        %1553 = vmatpush1.bf16.msra.mxu0 %v1319
        %1554 = vmatprep.subr.bf16.mxu0 %v1324
        %1555 = vmatpush1.bf16.msra.mxu0 %v1323
        %1556 = vmatprep.subr.bf16.mxu0 %v1328
        %1557 = vmatpush1.bf16.msra.mxu0 %v1327
        %1558 = vmatprep.subr.bf16.mxu0 %v1332
        %1559 = vmatpush1.bf16.msra.mxu0 %v1331
        %1560 = vmatprep.subr.bf16.mxu0 %v1336
        %1561 = vmatpush1.bf16.msra.mxu0 %v1335
        %1562 = vmatprep.subr.bf16.mxu0 %v1340
        %1563 = vmatpush1.bf16.msra.mxu0 %v1339
        %1564 = vmatprep.subr.bf16.mxu0 %v1344
        %1565 = vmatpush1.bf16.msra.mxu0 %v1343
        %1566 = vmatprep.subr.bf16.mxu0 %v1348
        %1567 = vmatpush1.bf16.msra.mxu0 %v1347
        %1568 = vmatprep.subr.bf16.mxu0 %v1352
        %1569 = vmatpush1.bf16.msra.mxu0 %v1351
        %1570 = vmatprep.subr.bf16.mxu0 %v1356
        %1571 = vmatpush1.bf16.msra.mxu0 %v1355
        %1572 = vmatprep.subr.bf16.mxu0 %v1360
        %1573 = vmatpush1.bf16.msra.mxu0 %v1359
        %1574 = vmatprep.subr.bf16.mxu0 %v1364
        %1575 = vmatpush1.bf16.msra.mxu0 %v1363
        %1576 = vmatprep.subr.bf16.mxu0 %v1368
        %1577 = vmatpush1.bf16.msra.mxu0 %v1367
        %1578 = vmatprep.subr.bf16.mxu0 %v1372
        %1579 = vmatpush1.bf16.msra.mxu0 %v1371
        %1580 = vmatprep.subr.bf16.mxu0 %v1376
        %1581 = vmatpush1.bf16.msra.mxu0 %v1375
        %1582 = vmatprep.mubr.bf16.mxu0 %v716
        %1583 = vmatmul.mubr.bf16.gmra.mrb[0].mxu0 %v715
        %v1584 = vpop.f32.mrb[0].mxu0
        %v1585 = vadd.f32 %v1542, %v1584
        %v1586 = vpop.f32.mrb[0].mxu0
        %v1587 = vadd.f32 %v1544, %v1586
        %v1588 = vpop.f32.mrb[0].mxu0
        %v1589 = vadd.f32 %v1546, %v1588
        %v1590 = vpop.f32.mrb[0].mxu0
        %v1591 = vadd.f32 %v1548, %v1590
        %1592 = vdwg.mxu0
        %1593 = vmatprep.subr.bf16.mxu0 %v1254
        %1594 = vmatpush1.bf16.msra.mxu0 %v1253
        %1595 = vmatprep.subr.bf16.mxu0 %v1258
        %1596 = vmatpush1.bf16.msra.mxu0 %v1257
        %1597 = vmatprep.subr.bf16.mxu0 %v1262
        %1598 = vmatpush1.bf16.msra.mxu0 %v1261
        %1599 = vmatprep.subr.bf16.mxu0 %v1266
        %1600 = vmatpush1.bf16.msra.mxu0 %v1265
        %1601 = vmatprep.subr.bf16.mxu0 %v1270
        %1602 = vmatpush1.bf16.msra.mxu0 %v1269
        %1603 = vmatprep.subr.bf16.mxu0 %v1274
        %1604 = vmatpush1.bf16.msra.mxu0 %v1273
        %1605 = vmatprep.subr.bf16.mxu0 %v1278
        %1606 = vmatpush1.bf16.msra.mxu0 %v1277
        %1607 = vmatprep.subr.bf16.mxu0 %v1282
        %1608 = vmatpush1.bf16.msra.mxu0 %v1281
        %1609 = vmatprep.subr.bf16.mxu0 %v1286
        %1610 = vmatpush1.bf16.msra.mxu0 %v1285
        %1611 = vmatprep.subr.bf16.mxu0 %v1290
        %1612 = vmatpush1.bf16.msra.mxu0 %v1289
        %1613 = vmatprep.subr.bf16.mxu0 %v1294
        %1614 = vmatpush1.bf16.msra.mxu0 %v1293
        %1615 = vmatprep.subr.bf16.mxu0 %v1298
        %1616 = vmatpush1.bf16.msra.mxu0 %v1297
        %1617 = vmatprep.subr.bf16.mxu0 %v1302
        %1618 = vmatpush1.bf16.msra.mxu0 %v1301
        %1619 = vmatprep.subr.bf16.mxu0 %v1306
        %1620 = vmatpush1.bf16.msra.mxu0 %v1305
        %1621 = vmatprep.subr.bf16.mxu0 %v1310
        %1622 = vmatpush1.bf16.msra.mxu0 %v1309
        %1623 = vmatprep.subr.bf16.mxu0 %v1314
        %1624 = vmatpush1.bf16.msra.mxu0 %v1313
        %1625 = vmatprep.mubr.bf16.mxu0 %v714
        %1626 = vmatmul.mubr.bf16.gmra.mrb[0].mxu0 %v713
        %v1627 = vpop.f32.mrb[0].mxu0
        %v1628 = vadd.f32 %v858, %v1627
        %v1629 = vpop.f32.mrb[0].mxu0
        %v1630 = vadd.f32 %v862, %v1629
        %v1631 = vpop.f32.mrb[0].mxu0
        %v1632 = vadd.f32 %v858, %v1631
        %v1633 = vpop.f32.mrb[0].mxu0
        %v1634 = vadd.f32 %v862, %v1633
        %1635 = vdwg.mxu0
        %1636 = vmatprep.subr.bf16.mxu0 %v1318
        %1637 = vmatpush1.bf16.msra.mxu0 %v1317
        %1638 = vmatprep.subr.bf16.mxu0 %v1322
        %1639 = vmatpush1.bf16.msra.mxu0 %v1321
        %1640 = vmatprep.subr.bf16.mxu0 %v1326
        %1641 = vmatpush1.bf16.msra.mxu0 %v1325
        %1642 = vmatprep.subr.bf16.mxu0 %v1330
        %1643 = vmatpush1.bf16.msra.mxu0 %v1329
        %1644 = vmatprep.subr.bf16.mxu0 %v1334
        %1645 = vmatpush1.bf16.msra.mxu0 %v1333
        %1646 = vmatprep.subr.bf16.mxu0 %v1338
        %1647 = vmatpush1.bf16.msra.mxu0 %v1337
        %1648 = vmatprep.subr.bf16.mxu0 %v1342
        %1649 = vmatpush1.bf16.msra.mxu0 %v1341
        %1650 = vmatprep.subr.bf16.mxu0 %v1346
        %1651 = vmatpush1.bf16.msra.mxu0 %v1345
        %1652 = vmatprep.subr.bf16.mxu0 %v1350
        %1653 = vmatpush1.bf16.msra.mxu0 %v1349
        %1654 = vmatprep.subr.bf16.mxu0 %v1354
        %1655 = vmatpush1.bf16.msra.mxu0 %v1353
        %1656 = vmatprep.subr.bf16.mxu0 %v1358
        %1657 = vmatpush1.bf16.msra.mxu0 %v1357
        %1658 = vmatprep.subr.bf16.mxu0 %v1362
        %1659 = vmatpush1.bf16.msra.mxu0 %v1361
        %1660 = vmatprep.subr.bf16.mxu0 %v1366
        %1661 = vmatpush1.bf16.msra.mxu0 %v1365
        %1662 = vmatprep.subr.bf16.mxu0 %v1370
        %1663 = vmatpush1.bf16.msra.mxu0 %v1369
        %1664 = vmatprep.subr.bf16.mxu0 %v1374
        %1665 = vmatpush1.bf16.msra.mxu0 %v1373
        %1666 = vmatprep.subr.bf16.mxu0 %v1378
        %1667 = vmatpush1.bf16.msra.mxu0 %v1377
        %1668 = vmatprep.mubr.bf16.mxu0 %v716
        %1669 = vmatmul.mubr.bf16.gmra.mrb[0].mxu0 %v715
        %v1670 = vpop.f32.mrb[0].mxu0
        %v1671 = vadd.f32 %v1628, %v1670
        %v1672 = vpop.f32.mrb[0].mxu0
        %v1673 = vadd.f32 %v1630, %v1672
        %v1674 = vpop.f32.mrb[0].mxu0
        %v1675 = vadd.f32 %v1632, %v1674
        %v1676 = vpop.f32.mrb[0].mxu0
        %v1677 = vadd.f32 %v1634, %v1676
        %1678 = vdwg.mxu0
        %v1679 = vmax.f32 %v1585, 0.0
        %v1680 = vmax.f32 %v1587, 0.0
        %v1681 = vmax.f32 %v1671, 0.0
        %v1682 = vmax.f32 %v1673, 0.0
        %v1683 = vmax.f32 %v1589, 0.0
        %v1684 = vmax.f32 %v1591, 0.0
        %v1685 = vmax.f32 %v1675, 0.0
        %v1686 = vmax.f32 %v1677, 0.0
        %v1687 = vadd.f32 %v1679, %v1680
        %v1688 = vadd.f32 %v1687, %v1681
        %v1689 = vadd.f32 %v1688, %v1682
        %1690 = vadd.xlane.f32.xlu0 %v1689
        %v1691 = vpop.xlane.xlu0 %1690
        %v1692 = vadd.f32 %v1683, %v1684
        %v1693 = vadd.f32 %v1692, %v1685
        %v1694 = vadd.f32 %v1693, %v1686
        %1695 = vadd.xlane.f32.xlu0 %v1694
        %v1696 = vpop.xlane.xlu0 %1695
        %v1697 = vmul.f32 %v1691, %v670
        %v1698 = vmul.f32 %v1696, %v670
        %v1699 = vsub.f32 %v1679, %v1697
        %v1700 = vsub.f32 %v1680, %v1697
        %v1701 = vsub.f32 %v1681, %v1697
        %v1702 = vsub.f32 %v1682, %v1697
        %v1703 = vsub.f32 %v1683, %v1698
        %v1704 = vsub.f32 %v1684, %v1698
        %v1705 = vsub.f32 %v1685, %v1698
        %v1706 = vsub.f32 %v1686, %v1698
        %v1707 = vmul.f32 %v1699, %v1699
        %v1708 = vmul.f32 %v1700, %v1700
        %v1709 = vmul.f32 %v1701, %v1701
        %v1710 = vmul.f32 %v1702, %v1702
        %v1711 = vmul.f32 %v1703, %v1703
        %v1712 = vmul.f32 %v1704, %v1704
        %v1713 = vmul.f32 %v1705, %v1705
        %v1714 = vmul.f32 %v1706, %v1706
        %v1715 = vadd.f32 %v1707, %v1708
        %v1716 = vadd.f32 %v1715, %v1709
        %v1717 = vadd.f32 %v1716, %v1710
        %1718 = vadd.xlane.f32.xlu0 %v1717
        %v1719 = vpop.xlane.xlu0 %1718
        %v1720 = vadd.f32 %v1711, %v1712
        %v1721 = vadd.f32 %v1720, %v1713
        %v1722 = vadd.f32 %v1721, %v1714
        %1723 = vadd.xlane.f32.xlu0 %v1722
        %v1724 = vpop.xlane.xlu0 %1723
        %v1725 = vmul.f32 %v1719, %v670
        %v1726 = vmul.f32 %v1724, %v670
        %v1727 = vadd.f32 %v1725, 1e-05
        %v1728 = vadd.f32 %v1726, 1e-05
        %v1729 = vrsqrt.pop %v1727
        %v1730 = vrsqrt.pop %v1728
        %v1731 = vmul.f32 %v1699, %v1729
        %v1732 = vmul.f32 %v1700, %v1729
        %v1733 = vmul.f32 %v1701, %v1729
        %v1734 = vmul.f32 %v1702, %v1729
        %v1735 = vmul.f32 %v1703, %v1730
        %v1736 = vmul.f32 %v1704, %v1730
        %v1737 = vmul.f32 %v1705, %v1730
        %v1738 = vmul.f32 %v1706, %v1730
        %v1739 = vpack.c.bf16 %v1735, %v1731
        %v1740 = vpack.c.bf16 %v1736, %v1732
        %v1741 = vpack.c.bf16 %v1737, %v1733
        %v1742 = vpack.c.bf16 %v1738, %v1734
        %v1743 = vld [vmem:[#allocation8] sm:$0xf]
        %v1744 = vld [vmem:[#allocation8 + $0x4] sm:$0xf]
        %v1745 = vld [vmem:[#allocation8 + $0x8] sm:$0xf]
        %v1746 = vld [vmem:[#allocation8 + $0xc] sm:$0xf]
        %v1747 = vld [vmem:[#allocation8 + $0x10] sm:$0xf]
        %v1748 = vld [vmem:[#allocation8 + $0x14] sm:$0xf]
        %v1749 = vld [vmem:[#allocation8 + $0x18] sm:$0xf]
        %v1750 = vld [vmem:[#allocation8 + $0x1c] sm:$0xf]
        %v1751 = vld [vmem:[#allocation8 + $0x20] sm:$0xf]
        %v1752 = vld [vmem:[#allocation8 + $0x24] sm:$0xf]
        %v1753 = vld [vmem:[#allocation8 + $0x28] sm:$0xf]
        %v1754 = vld [vmem:[#allocation8 + $0x2c] sm:$0xf]
        %v1755 = vld [vmem:[#allocation8 + $0x30] sm:$0xf]
        %v1756 = vld [vmem:[#allocation8 + $0x34] sm:$0xf]
        %v1757 = vld [vmem:[#allocation8 + $0x38] sm:$0xf]
        %v1758 = vld [vmem:[#allocation8 + $0x3c] sm:$0xf]
        %v1759 = vld [vmem:[#allocation8 + $0x40] sm:$0xf]
        %v1760 = vld [vmem:[#allocation8 + $0x44] sm:$0xf]
        %v1761 = vld [vmem:[#allocation8 + $0x48] sm:$0xf]
        %v1762 = vld [vmem:[#allocation8 + $0x4c] sm:$0xf]
        %v1763 = vld [vmem:[#allocation8 + $0x50] sm:$0xf]
        %v1764 = vld [vmem:[#allocation8 + $0x54] sm:$0xf]
        %v1765 = vld [vmem:[#allocation8 + $0x58] sm:$0xf]
        %v1766 = vld [vmem:[#allocation8 + $0x5c] sm:$0xf]
        %v1767 = vld [vmem:[#allocation8 + $0x60] sm:$0xf]
        %v1768 = vld [vmem:[#allocation8 + $0x64] sm:$0xf]
        %v1769 = vld [vmem:[#allocation8 + $0x68] sm:$0xf]
        %v1770 = vld [vmem:[#allocation8 + $0x6c] sm:$0xf]
        %v1771 = vld [vmem:[#allocation8 + $0x70] sm:$0xf]
        %v1772 = vld [vmem:[#allocation8 + $0x74] sm:$0xf]
        %v1773 = vld [vmem:[#allocation8 + $0x78] sm:$0xf]
        %v1774 = vld [vmem:[#allocation8 + $0x7c] sm:$0xf]
        %v1775 = vld [vmem:[#allocation8 + $0x80] sm:$0xf]
        %v1776 = vld [vmem:[#allocation8 + $0x84] sm:$0xf]
        %v1777 = vld [vmem:[#allocation8 + $0x88] sm:$0xf]
        %v1778 = vld [vmem:[#allocation8 + $0x8c] sm:$0xf]
        %v1779 = vld [vmem:[#allocation8 + $0x90] sm:$0xf]
        %v1780 = vld [vmem:[#allocation8 + $0x94] sm:$0xf]
        %v1781 = vld [vmem:[#allocation8 + $0x98] sm:$0xf]
        %v1782 = vld [vmem:[#allocation8 + $0x9c] sm:$0xf]
        %v1783 = vld [vmem:[#allocation8 + $0xa0] sm:$0xf]
        %v1784 = vld [vmem:[#allocation8 + $0xa4] sm:$0xf]
        %v1785 = vld [vmem:[#allocation8 + $0xa8] sm:$0xf]
        %v1786 = vld [vmem:[#allocation8 + $0xac] sm:$0xf]
        %v1787 = vld [vmem:[#allocation8 + $0xb0] sm:$0xf]
        %v1788 = vld [vmem:[#allocation8 + $0xb4] sm:$0xf]
        %v1789 = vld [vmem:[#allocation8 + $0xb8] sm:$0xf]
        %v1790 = vld [vmem:[#allocation8 + $0xbc] sm:$0xf]
        %v1791 = vld [vmem:[#allocation8 + $0xc0] sm:$0xf]
        %v1792 = vld [vmem:[#allocation8 + $0xc4] sm:$0xf]
        %v1793 = vld [vmem:[#allocation8 + $0xc8] sm:$0xf]
        %v1794 = vld [vmem:[#allocation8 + $0xcc] sm:$0xf]
        %v1795 = vld [vmem:[#allocation8 + $0xd0] sm:$0xf]
        %v1796 = vld [vmem:[#allocation8 + $0xd4] sm:$0xf]
        %v1797 = vld [vmem:[#allocation8 + $0xd8] sm:$0xf]
        %v1798 = vld [vmem:[#allocation8 + $0xdc] sm:$0xf]
        %v1799 = vld [vmem:[#allocation8 + $0xe0] sm:$0xf]
        %v1800 = vld [vmem:[#allocation8 + $0xe4] sm:$0xf]
        %v1801 = vld [vmem:[#allocation8 + $0xe8] sm:$0xf]
        %v1802 = vld [vmem:[#allocation8 + $0xec] sm:$0xf]
        %v1803 = vld [vmem:[#allocation8 + $0xf0] sm:$0xf]
        %v1804 = vld [vmem:[#allocation8 + $0xf4] sm:$0xf]
        %v1805 = vld [vmem:[#allocation8 + $0xf8] sm:$0xf]
        %v1806 = vld [vmem:[#allocation8 + $0xfc] sm:$0xf]
        %v1807 = vld [vmem:[%s6] sm:$0x1]
        %v1809 = vlaneseq
        %v1810 = vshrl.u32 %v1809, 7
        %v1811 = vsub.s32 0, %v1810
        %v1812 = vrot.slane %v1807, %v1811
        %v1878 = vunpack.c.l.b16 %v1743
        %v1879 = vunpack.c.l.b16 %v1744
        %v1880 = vunpack.c.l.b16 %v1745
        %v1881 = vunpack.c.l.b16 %v1746
        %v1882 = vunpack.c.l.b16 %v1747
        %v1883 = vunpack.c.l.b16 %v1748
        %v1884 = vunpack.c.l.b16 %v1749
        %v1885 = vunpack.c.l.b16 %v1750
        %v1886 = vunpack.c.l.b16 %v1751
        %v1887 = vunpack.c.l.b16 %v1752
        %v1888 = vunpack.c.l.b16 %v1753
        %v1889 = vunpack.c.l.b16 %v1754
        %v1890 = vunpack.c.l.b16 %v1755
        %v1891 = vunpack.c.l.b16 %v1756
        %v1892 = vunpack.c.l.b16 %v1757
        %v1893 = vunpack.c.l.b16 %v1758
        %v1894 = vunpack.c.l.b16 %v1759
        %v1895 = vunpack.c.l.b16 %v1760
        %v1896 = vunpack.c.l.b16 %v1761
        %v1897 = vunpack.c.l.b16 %v1762
        %v1898 = vunpack.c.l.b16 %v1763
        %v1899 = vunpack.c.l.b16 %v1764
        %v1900 = vunpack.c.l.b16 %v1765
        %v1901 = vunpack.c.l.b16 %v1766
        %v1902 = vunpack.c.l.b16 %v1767
        %v1903 = vunpack.c.l.b16 %v1768
        %v1904 = vunpack.c.l.b16 %v1769
        %v1905 = vunpack.c.l.b16 %v1770
        %v1906 = vunpack.c.l.b16 %v1771
        %v1907 = vunpack.c.l.b16 %v1772
        %v1908 = vunpack.c.l.b16 %v1773
        %v1909 = vunpack.c.l.b16 %v1774
        %v1910 = vunpack.c.l.b16 %v1775
        %v1911 = vunpack.c.l.b16 %v1776
        %v1912 = vunpack.c.l.b16 %v1777
        %v1913 = vunpack.c.l.b16 %v1778
        %v1914 = vunpack.c.l.b16 %v1779
        %v1915 = vunpack.c.l.b16 %v1780
        %v1916 = vunpack.c.l.b16 %v1781
        %v1917 = vunpack.c.l.b16 %v1782
        %v1918 = vunpack.c.l.b16 %v1783
        %v1919 = vunpack.c.l.b16 %v1784
        %v1920 = vunpack.c.l.b16 %v1785
        %v1921 = vunpack.c.l.b16 %v1786
        %v1922 = vunpack.c.l.b16 %v1787
        %v1923 = vunpack.c.l.b16 %v1788
        %v1924 = vunpack.c.l.b16 %v1789
        %v1925 = vunpack.c.l.b16 %v1790
        %v1926 = vunpack.c.l.b16 %v1791
        %v1927 = vunpack.c.l.b16 %v1792
        %v1928 = vunpack.c.l.b16 %v1793
        %v1929 = vunpack.c.l.b16 %v1794
        %v1930 = vunpack.c.l.b16 %v1795
        %v1931 = vunpack.c.l.b16 %v1796
        %v1932 = vunpack.c.l.b16 %v1797
        %v1933 = vunpack.c.l.b16 %v1798
        %v1934 = vunpack.c.l.b16 %v1799
        %v1935 = vunpack.c.l.b16 %v1800
        %v1936 = vunpack.c.l.b16 %v1801
        %v1937 = vunpack.c.l.b16 %v1802
        %v1938 = vunpack.c.l.b16 %v1803
        %v1939 = vunpack.c.l.b16 %v1804
        %v1940 = vunpack.c.l.b16 %v1805
        %v1941 = vunpack.c.l.b16 %v1806
        %v1942 = vpack.c.b16 %v1879, %v1878
        %v1943 = vpack.c.b16 %v1881, %v1880
        %v1944 = vpack.c.b16 %v1883, %v1882
        %v1945 = vpack.c.b16 %v1885, %v1884
        %v1946 = vpack.c.b16 %v1887, %v1886
        %v1947 = vpack.c.b16 %v1889, %v1888
        %v1948 = vpack.c.b16 %v1891, %v1890
        %v1949 = vpack.c.b16 %v1893, %v1892
        %v1950 = vpack.c.b16 %v1895, %v1894
        %v1951 = vpack.c.b16 %v1897, %v1896
        %v1952 = vpack.c.b16 %v1899, %v1898
        %v1953 = vpack.c.b16 %v1901, %v1900
        %v1954 = vpack.c.b16 %v1903, %v1902
        %v1955 = vpack.c.b16 %v1905, %v1904
        %v1956 = vpack.c.b16 %v1907, %v1906
        %v1957 = vpack.c.b16 %v1909, %v1908
        %v1958 = vpack.c.b16 %v1911, %v1910
        %v1959 = vpack.c.b16 %v1913, %v1912
        %v1960 = vpack.c.b16 %v1915, %v1914
        %v1961 = vpack.c.b16 %v1917, %v1916
        %v1962 = vpack.c.b16 %v1919, %v1918
        %v1963 = vpack.c.b16 %v1921, %v1920
        %v1964 = vpack.c.b16 %v1923, %v1922
        %v1965 = vpack.c.b16 %v1925, %v1924
        %v1966 = vpack.c.b16 %v1927, %v1926
        %v1967 = vpack.c.b16 %v1929, %v1928
        %v1968 = vpack.c.b16 %v1931, %v1930
        %v1969 = vpack.c.b16 %v1933, %v1932
        %v1970 = vpack.c.b16 %v1935, %v1934
        %v1971 = vpack.c.b16 %v1937, %v1936
        %v1972 = vpack.c.b16 %v1939, %v1938
        %v1973 = vpack.c.b16 %v1941, %v1940
        %2006 = vmatprep.subr.bf16.mxu0 0
        %2007 = vmatpush1.bf16.msra.mxu0 %v1942
        %2008 = vmatprep.subr.bf16.mxu0 0
        %2009 = vmatpush1.bf16.msra.mxu0 %v1943
        %2010 = vmatprep.subr.bf16.mxu0 0
        %2011 = vmatpush1.bf16.msra.mxu0 %v1944
        %2012 = vmatprep.subr.bf16.mxu0 0
        %2013 = vmatpush1.bf16.msra.mxu0 %v1945
        %2014 = vmatprep.subr.bf16.mxu0 0
        %2015 = vmatpush1.bf16.msra.mxu0 %v1946
        %2016 = vmatprep.subr.bf16.mxu0 0
        %2017 = vmatpush1.bf16.msra.mxu0 %v1947
        %2018 = vmatprep.subr.bf16.mxu0 0
        %2019 = vmatpush1.bf16.msra.mxu0 %v1948
        %2020 = vmatprep.subr.bf16.mxu0 0
        %2021 = vmatpush1.bf16.msra.mxu0 %v1949
        %2022 = vmatprep.subr.bf16.mxu0 0
        %2023 = vmatpush1.bf16.msra.mxu0 %v1950
        %2024 = vmatprep.subr.bf16.mxu0 0
        %2025 = vmatpush1.bf16.msra.mxu0 %v1951
        %2026 = vmatprep.subr.bf16.mxu0 0
        %2027 = vmatpush1.bf16.msra.mxu0 %v1952
        %2028 = vmatprep.subr.bf16.mxu0 0
        %2029 = vmatpush1.bf16.msra.mxu0 %v1953
        %2030 = vmatprep.subr.bf16.mxu0 0
        %2031 = vmatpush1.bf16.msra.mxu0 %v1954
        %2032 = vmatprep.subr.bf16.mxu0 0
        %2033 = vmatpush1.bf16.msra.mxu0 %v1955
        %2034 = vmatprep.subr.bf16.mxu0 0
        %2035 = vmatpush1.bf16.msra.mxu0 %v1956
        %2036 = vmatprep.subr.bf16.mxu0 0
        %2037 = vmatpush1.bf16.msra.mxu0 %v1957
        %2038 = vmatprep.mubr.bf16.mxu0 %v1740
        %2039 = vmatmul.mubr.bf16.gmra.mrb[0].mxu0 %v1739
        %v2040 = vpop.f32.mrb[0].mxu0
        %v2041 = vadd.f32 %v1812, %v2040
        %v2042 = vpop.f32.mrb[0].mxu0
        %v2043 = vpop.f32.mrb[0].mxu0
        %v2044 = vadd.f32 %v1812, %v2043
        %v2045 = vpop.f32.mrb[0].mxu0
        %2046 = vdwg.mxu0
        %2047 = vmatprep.subr.bf16.mxu0 0
        %2048 = vmatpush1.bf16.msra.mxu0 %v1958
        %2049 = vmatprep.subr.bf16.mxu0 0
        %2050 = vmatpush1.bf16.msra.mxu0 %v1959
        %2051 = vmatprep.subr.bf16.mxu0 0
        %2052 = vmatpush1.bf16.msra.mxu0 %v1960
        %2053 = vmatprep.subr.bf16.mxu0 0
        %2054 = vmatpush1.bf16.msra.mxu0 %v1961
        %2055 = vmatprep.subr.bf16.mxu0 0
        %2056 = vmatpush1.bf16.msra.mxu0 %v1962
        %2057 = vmatprep.subr.bf16.mxu0 0
        %2058 = vmatpush1.bf16.msra.mxu0 %v1963
        %2059 = vmatprep.subr.bf16.mxu0 0
        %2060 = vmatpush1.bf16.msra.mxu0 %v1964
        %2061 = vmatprep.subr.bf16.mxu0 0
        %2062 = vmatpush1.bf16.msra.mxu0 %v1965
        %2063 = vmatprep.subr.bf16.mxu0 0
        %2064 = vmatpush1.bf16.msra.mxu0 %v1966
        %2065 = vmatprep.subr.bf16.mxu0 0
        %2066 = vmatpush1.bf16.msra.mxu0 %v1967
        %2067 = vmatprep.subr.bf16.mxu0 0
        %2068 = vmatpush1.bf16.msra.mxu0 %v1968
        %2069 = vmatprep.subr.bf16.mxu0 0
        %2070 = vmatpush1.bf16.msra.mxu0 %v1969
        %2071 = vmatprep.subr.bf16.mxu0 0
        %2072 = vmatpush1.bf16.msra.mxu0 %v1970
        %2073 = vmatprep.subr.bf16.mxu0 0
        %2074 = vmatpush1.bf16.msra.mxu0 %v1971
        %2075 = vmatprep.subr.bf16.mxu0 0
        %2076 = vmatpush1.bf16.msra.mxu0 %v1972
        %2077 = vmatprep.subr.bf16.mxu0 0
        %2078 = vmatpush1.bf16.msra.mxu0 %v1973
        %2079 = vmatprep.mubr.bf16.mxu0 %v1742
        %2080 = vmatmul.mubr.bf16.gmra.mrb[0].mxu0 %v1741
        %v2081 = vpop.f32.mrb[0].mxu0
        %v2082 = vadd.f32 %v2041, %v2081
        %v2083 = vpop.f32.mrb[0].mxu0
        %v2084 = vpop.f32.mrb[0].mxu0
        %v2085 = vadd.f32 %v2044, %v2084
        %v2086 = vpop.f32.mrb[0].mxu0
        %2087 = vdwg.mxu0
        %v2088 = vpack.c.bf16 %v2085, %v2082
        %v2090 = vunpack.c.l.b16 %v2088
        %v2091 = vunpack.c.h.b16 %v2088
        %v2092 = vpack.c.b16 %v2090, %v2090
        %v2093 = vpack.c.b16 %v2091, %v2091
        %2096 = vst [vmem:[%s340] sm:$0xf] %v2092
        %2097 = vst [vmem:[%s340 + $0x4] sm:$0xf] %v2093
        %s2098 = sand.u32 %s186, 1
        %s2099 = scalar_lea.sflag [#allocation4], %s2098
        %s2100 = sand.u32 %s186, 1
        %s2101 = smul.addr %s2100, 8
        %s2102 = scalar_lea.vmem [#allocation10], %s2101
        // Predicated region
        $region65: #{tpu_custom_call.1} parent=47 // pred_check
          %p2103 = pneg %p196
        $region66: #{tpu_custom_call.1} parent=47 // pred_check_branch
          %2105 = sbr.rel (%p2103) target = $region68
        $region67: #{tpu_custom_call.1} parent=47 // pred_region
          %s2106 = smul.u32 2, %s26
          %s2108 = ssub.s32 128, 128
          %2109 = vsyncadd %s2099, %s2108
          %s2110 = smul.addr %s2106, 64
          %s2111 = scalar_lea.hbm %s7, %s2110
          %s2112 = sshll.u32 %s2102, 4
          %s2113 = int_to_ptr.vmem [resolvable:$true] %s2112
          %2118 = dma.vmem_to_hbm [thread:$0]  %s2113, 128, %s2111, %s2099, 64, 64, 4
        $region68: #{tpu_custom_call.1} parent=47 // pred_fallthru
          _
      $region48: #{tpu_custom_call.1} parent=5 // pred_fallthru
        _
      %p2119 = scmp.le.s32.totalorder 2, %s21
      // Predicated region
      $region69: #{tpu_custom_call.1} parent=5 // pred_check
        %p2120 = pneg %p2119
      $region70: #{tpu_custom_call.1} parent=5 // pred_check_branch
        %2122 = sbr.rel (%p2120) target = $region72
      $region71: #{tpu_custom_call.1} parent=5 // pred_region
        %s2123 = ssub.s32 %s21, 2
        // Predicated region
        $region73: #{tpu_custom_call.1} parent=71 // pred_check
          %p2124 = pneg %p202
        $region74: #{tpu_custom_call.1} parent=71 // pred_check_branch
          %2126 = sbr.rel (%p2124) target = $region76
        $region75: #{tpu_custom_call.1} parent=71 // pred_region
          %s2127 = sand.u32 %s187, 1
          %s2128 = scalar_lea.sflag [#allocation4], %s2127
          %s2129 = sand.u32 %s187, 1
          %s2130 = smul.addr %s2129, 8
          %s2131 = scalar_lea.vmem [#allocation10], %s2130
          %2132 = dma.done %s2128, 128
        $region76: #{tpu_custom_call.1} parent=71 // pred_fallthru
          _
      $region72: #{tpu_custom_call.1} parent=5 // pred_fallthru
        _
    $region6: #{tpu_custom_call.1} parent=1 // loop_footer
      %s25 = sadd.s32 1, %s21
    $region7: #{tpu_custom_call.1} parent=1 // loop_footer_branch
      %20 = sbr.rel target = $region3
    $region8: #{tpu_custom_call.1} parent=1 // loop_exit
      _
    %2133 = vsyncpa [#allocation3], 1
    %s2134 = scalar_lea.sflag [#allocation3], 1
    %2135 = vsyncpa %s2134, 1
    %2136 = vsyncpa [#allocation6], 1
    %2137 = vsyncpa [#allocation9], 1
    %2138 = vsyncpa [#allocation4], 1
    %s2139 = scalar_lea.sflag [#allocation4], 1
    %2140 = vsyncpa %s2139, 1

</llo_original>
